<compile_context>
chip_gen: v5e
topology: v5e:2x2
jax: 0.10.0
libtpu: 0.0.40
codegen_flags: <defaults>
</compile_context>

<pallas_src>
import functools

import jax
import jax.numpy as jnp
import numpy as np
from jax import lax
from jax.experimental import pallas as pl
from jax.experimental.pallas import tpu as pltpu


def _layernorm(h, w, b, eps=1e-5):
    # f32 elementwise path (v5e VPU has no bf16).
    mu = jnp.mean(h, axis=-1, keepdims=True)
    var = jnp.mean((h - mu) ** 2, axis=-1, keepdims=True)
    return (h - mu) * lax.rsqrt(var + eps) * w + b


def _gelu_tanh(x):
    # GELU with tanh approximation (matches nn.GELU(approximate='tanh')).
    return 0.5 * x * (1.0 + jnp.tanh(0.7978845608028654 * (x + 0.044715 * x * x * x)))


def block_kernel(x_ref,
                 ln1w_ref, ln1b_ref,
                 wattn_ref, battn_ref,
                 wproj_ref, bproj_ref,
                 ln2w_ref, ln2b_ref,
                 wfc_ref, bfc_ref,
                 wfcp_ref, bfcp_ref,
                 o_ref,
                 q_scr, k_scr, v_scr,
                 *, n_head, tq, mlp_chunk):
    T, C = x_ref.shape                 # x block is the full sequence (T, C) of one batch elem
    hd = C // n_head
    Hmlp = wfc_ref.shape[1]
    scale = 1.0 / float(np.sqrt(hd))
    qi = pl.program_id(1)

    # ---- once per batch element: ln_1 + fused QKV projection ----------------
    # Stored head-major (n_head, T, hd) in bf16 scratch that persists across
    # the q-tile grid axis.  Q is pre-scaled by 1/sqrt(hd).
    @pl.when(qi == 0)
    def _init_qkv():
        h = _layernorm(x_ref[...], ln1w_ref[...], ln1b_ref[...]).astype(jnp.bfloat16)
        qkv = jnp.dot(h, wattn_ref[...],
                      preferred_element_type=jnp.float32) + battn_ref[...]   # (T, 3C) f32
        # One-time head-major relayout, amortized over all q-tiles of this
        # batch element.
        # TODO(synk): fold this split into the c_attn weight layout once a
        # non-batched 3-D dot lowers cleanly; a per-head matmul loop would
        # instead underfeed the MXU contraction width when hd < 128.
        for hh in range(n_head):
            q_scr[hh] = (qkv[:, hh * hd:(hh + 1) * hd] * scale).astype(jnp.bfloat16)
            k_scr[hh] = qkv[:, C + hh * hd: C + (hh + 1) * hd].astype(jnp.bfloat16)
            v_scr[hh] = qkv[:, 2 * C + hh * hd: 2 * C + (hh + 1) * hd].astype(jnp.bfloat16)

    # ---- per q-tile: causal flash attention over key tiles 0..qi -------------
    row0 = pl.multiple_of(qi * tq, tq)
    q_t = q_scr[:, pl.ds(row0, tq), :]                       # (H, tq, hd) bf16, pre-scaled
    rows = row0 + lax.broadcasted_iota(jnp.int32, (tq, tq), 0)

    def kv_step(kt, carry):
        m, l, acc = carry
        k0 = pl.multiple_of(kt * tq, tq)
        k_t = k_scr[:, pl.ds(k0, tq), :]                     # (H, tq, hd) bf16
        v_t = v_scr[:, pl.ds(k0, tq), :]                     # (H, tq, hd) bf16
        # contract last dims directly (no k.T materialized), f32 accumulate
        s = jnp.einsum('htd,hsd->hts', q_t, k_t,
                       preferred_element_type=jnp.float32)   # (H, tq, tq)
        cols = k0 + lax.broadcasted_iota(jnp.int32, (tq, tq), 1)
        s = jnp.where((cols <= rows)[None, :, :], s, -1e30)  # only the diagonal tile is
                                                             # actually affected; tiles kt<qi
                                                             # are fully unmasked.
        m_new = jnp.maximum(m, jnp.max(s, axis=-1, keepdims=True))
        alpha = jnp.exp(m - m_new)
        p = jnp.exp(s - m_new)
        l_new = alpha * l + jnp.sum(p, axis=-1, keepdims=True)
        acc_new = alpha * acc + jnp.einsum('hts,hsd->htd', p.astype(jnp.bfloat16), v_t,
                                           preferred_element_type=jnp.float32)
        return m_new, l_new, acc_new

    m0 = jnp.full((n_head, tq, 1), -jnp.inf, jnp.float32)
    l0 = jnp.zeros((n_head, tq, 1), jnp.float32)
    a0 = jnp.zeros((n_head, tq, hd), jnp.float32)
    # only key tiles 0..qi (causality) -> ~2x fewer MXU flops / exp() vs full T
    m, l, acc = lax.fori_loop(0, qi + 1, kv_step, (m0, l0, a0))

    # normalize AFTER P.V: scales (H, tq, hd) instead of (H, tq, T); EUP reciprocal
    y = acc * pl.reciprocal(l, approx=True)

    # merge heads back to (tq, C) for the output projection
    # TODO(synk): folding the merge into wproj via a per-head batched matmul trades
    # this lane concat for an hd-wide (<128) MXU contraction; kept as concat.
    y2 = jnp.concatenate([y[hh] for hh in range(n_head)], axis=-1).astype(jnp.bfloat16)

    attn = jnp.dot(y2, wproj_ref[...],
                   preferred_element_type=jnp.float32) + bproj_ref[...]

    x_t = x_ref[pl.ds(row0, tq), :]                          # (tq, C)
    x1 = x_t + attn                                          # first residual

    # ---- ln_2 + MLP (hidden dim chunked to bound the live intermediate) ------
    h2 = _layernorm(x1, ln2w_ref[...], ln2b_ref[...]).astype(jnp.bfloat16)
    mlp = jnp.zeros((tq, C), jnp.float32)
    for c0 in range(0, Hmlp, mlp_chunk):
        hfc = jnp.dot(h2, wfc_ref[:, c0:c0 + mlp_chunk],
                      preferred_element_type=jnp.float32) + bfc_ref[:, c0:c0 + mlp_chunk]
        g = _gelu_tanh(hfc).astype(jnp.bfloat16)
        mlp = mlp + jnp.dot(g, wfcp_ref[c0:c0 + mlp_chunk, :],
                            preferred_element_type=jnp.float32)
    mlp = mlp + bfcp_ref[...]

    o_ref[...] = (x1 + mlp).astype(o_ref.dtype)


def block_forward(x, params, n_head, tq=None):
    B, T, C = x.shape
    Hmlp = 4 * C
    hd = C // n_head
    assert C % n_head == 0
    if tq is None:
        # Portable default.  On v6e/v7x, tq=256 feeds the 256-wide MXU M dim
        # better when T allows; v5e (128-wide MXU) is fine at 128.
        tq = min(T, 128)
    assert T % tq == 0, "q-tile must divide T"
    assert tq % 16 == 0 or tq == T, "q-tile must be bf16-sublane aligned"
    nq = T // tq

    (ln1w, ln1b, wattn, battn, wproj, bproj,
     ln2w, ln2b, wfc, bfc, wfcp, bfcp) = params

    # Big matmul weights in bf16 (native MXU rate, half the VMEM); LN params
    # and biases stay f32 (added to f32 accumulators / elementwise path).
    wattn_b = wattn.astype(jnp.bfloat16)
    wproj_b = wproj.astype(jnp.bfloat16)
    wfc_b = wfc.astype(jnp.bfloat16)
    wfcp_b = wfcp.astype(jnp.bfloat16)

    # Chunk the MLP hidden dim so the f32 (tq, chunk) intermediate stays bounded.
    mlp_chunk = Hmlp if Hmlp <= 1024 else C
    assert Hmlp % mlp_chunk == 0

    kernel = functools.partial(block_kernel, n_head=n_head, tq=tq, mlp_chunk=mlp_chunk)

    def full(shape):
        # whole array as one block; constant block index -> fetched once, never re-DMA'd
        # TODO(synk): single-buffer these via pipeline_mode=pl.Buffered(1) to halve
        # their resident VMEM on v7x once that path is validated on all targets.
        return pl.BlockSpec(shape, lambda b, qi: (0,) * len(shape))

    in_specs = [
        pl.BlockSpec((None, T, C), lambda b, qi: (b, 0, 0)),   # x (full seq of batch b)
        full((1, C)), full((1, C)),                            # ln_1 w, b
        full((C, 3 * C)), full((1, 3 * C)),                    # c_attn W (bf16), b
        full((C, C)), full((1, C)),                            # attn c_proj W (bf16), b
        full((1, C)), full((1, C)),                            # ln_2 w, b
        full((C, Hmlp)), full((1, Hmlp)),                      # mlp c_fc W (bf16), b
        full((Hmlp, C)), full((1, C)),                         # mlp c_proj W (bf16), b
    ]

    # Explicit VMEM budget: bf16 weights (assume double-buffered worst case) +
    # bf16 head-major scratch (hd planes pad to 128 lanes) + x/out blocks +
    # headroom; capped below v7x's 64 MiB per TensorCore.
    lane_hd = ((hd + 127) // 128) * 128
    weight_bytes = 2 * 2 * int(wattn_b.size + wproj_b.size + wfc_b.size + wfcp_b.size)
    scratch_bytes = 3 * n_head * T * lane_hd * 2
    block_bytes = 2 * (T * C + 2 * tq * C) * 4
    vmem_limit = int(min(max(weight_bytes + scratch_bytes + block_bytes + (8 << 20),
                             32 << 20), 56 << 20))

    return pl.pallas_call(
        kernel,
        out_shape=jax.ShapeDtypeStruct((B, T, C), x.dtype),
        grid_spec=pltpu.PrefetchScalarGridSpec(
            num_scalar_prefetch=0,
            grid=(B, nq),
            in_specs=in_specs,
            out_specs=pl.BlockSpec((None, tq, C), lambda b, qi: (b, qi, 0)),
            scratch_shapes=[
                pltpu.VMEM((n_head, T, hd), jnp.bfloat16),     # Q (pre-scaled), head-major
                pltpu.VMEM((n_head, T, hd), jnp.bfloat16),     # K
                pltpu.VMEM((n_head, T, hd), jnp.bfloat16),     # V
            ]),
        compiler_params=pltpu.CompilerParams(
            dimension_semantics=("parallel", "arbitrary"),     # K/V scratch carried along qi
            vmem_limit_bytes=vmem_limit),
    )(x, ln1w, ln1b, wattn_b, battn, wproj_b, bproj,
      ln2w, ln2b, wfc_b, bfc, wfcp_b, bfcp)


# ---- pure-JAX f32 reference for sanity check ------------------------------
def block_reference(x, params, n_head):
    (ln1w, ln1b, wattn, battn, wproj, bproj,
     ln2w, ln2b, wfc, bfc, wfcp, bfcp) = params
    B, T, C = x.shape
    hd = C // n_head

    def ln(h, w, b):
        mu = h.mean(-1, keepdims=True)
        var = ((h - mu) ** 2).mean(-1, keepdims=True)
        return (h - mu) / jnp.sqrt(var + 1e-5) * w[0] + b[0]

    h = ln(x, ln1w, ln1b)
    qkv = h @ wattn + battn[0]
    q, k, v = jnp.split(qkv, 3, axis=-1)
    q = q.reshape(B, T, n_head, hd).transpose(0, 2, 1, 3)
    k = k.reshape(B, T, n_head, hd).transpose(0, 2, 1, 3)
    v = v.reshape(B, T, n_head, hd).transpose(0, 2, 1, 3)
    s = jnp.einsum("bhqd,bhkd->bhqk", q, k) / jnp.sqrt(hd)
    mask = jnp.tril(jnp.ones((T, T), bool))
    s = jnp.where(mask, s, -1e30)
    p = jax.nn.softmax(s, axis=-1)
    y = jnp.einsum("bhqk,bhkd->bhqd", p, v).transpose(0, 2, 1, 3).reshape(B, T, C)
    x = x + y @ wproj + bproj[0]
    h2 = ln(x, ln2w, ln2b)
    g = _gelu_tanh(h2 @ wfc + bfc[0])
    return x + g @ wfcp + bfcp[0]


if __name__ == "__main__":
    # Small GPT config: n_embd=32, n_head=4, seq=32 (two q-tiles of 16), batch=2
    B, T, C, n_head = 2, 32, 32, 4
    Hmlp = 4 * C

    key = jax.random.PRNGKey(0)
    keys = jax.random.split(key, 9)
    s = 0.02
    params = (
        jnp.ones((1, C), jnp.float32),                                   # ln_1 weight
        jnp.zeros((1, C), jnp.float32),                                  # ln_1 bias
        s * jax.random.normal(keys[0], (C, 3 * C), jnp.float32),         # c_attn W
        s * jax.random.normal(keys[1], (1, 3 * C), jnp.float32),         # c_attn b
        s * jax.random.normal(keys[2], (C, C), jnp.float32),             # attn c_proj W
        s * jax.random.normal(keys[3], (1, C), jnp.float32),             # attn c_proj b
        jnp.ones((1, C), jnp.float32),                                   # ln_2 weight
        jnp.zeros((1, C), jnp.float32),                                  # ln_2 bias
        s * jax.random.normal(keys[4], (C, Hmlp), jnp.float32),          # mlp c_fc W
        s * jax.random.normal(keys[5], (1, Hmlp), jnp.float32),          # mlp c_fc b
        s * jax.random.normal(keys[6], (Hmlp, C), jnp.float32),          # mlp c_proj W
        s * jax.random.normal(keys[7], (1, C), jnp.float32),             # mlp c_proj b
    )

    x = jax.random.normal(keys[8], (B, T, C), jnp.float32)

    out = block_forward(x, params, n_head, tq=16)
    out = jax.block_until_ready(out)

    ref = block_reference(x, params, n_head)
    assert out.shape == (B, T, C)
    # bf16 matmul operands / bf16 K,V scratch with f32 accumulation and approx
    # softmax reciprocal -> loosened tolerance vs the f32 reference.
    np.testing.assert_allclose(np.asarray(out), np.asarray(ref), atol=2e-2, rtol=2e-2)

    print("KERNEL_OK")
</pallas_src>

<mosaic_0001>
module attributes {stable_mosaic.version = 11 : i64} {
  func.func @block_kernel(%arg0: i32, %arg1: i32, %arg2: memref<1x32x32xf32, #tpu.memory_space<vmem>>, %arg3: memref<1x32xf32, #tpu.memory_space<vmem>>, %arg4: memref<1x32xf32, #tpu.memory_space<vmem>>, %arg5: memref<32x96xbf16, #tpu.memory_space<vmem>>, %arg6: memref<1x96xf32, #tpu.memory_space<vmem>>, %arg7: memref<32x32xbf16, #tpu.memory_space<vmem>>, %arg8: memref<1x32xf32, #tpu.memory_space<vmem>>, %arg9: memref<1x32xf32, #tpu.memory_space<vmem>>, %arg10: memref<1x32xf32, #tpu.memory_space<vmem>>, %arg11: memref<32x128xbf16, #tpu.memory_space<vmem>>, %arg12: memref<1x128xf32, #tpu.memory_space<vmem>>, %arg13: memref<128x32xbf16, #tpu.memory_space<vmem>>, %arg14: memref<1x32xf32, #tpu.memory_space<vmem>>, %arg15: memref<1x16x32xf32, #tpu.memory_space<vmem>>, %arg16: memref<4x32x8xbf16, #tpu.memory_space<vmem>>, %arg17: memref<4x32x8xbf16, #tpu.memory_space<vmem>>, %arg18: memref<4x32x8xbf16, #tpu.memory_space<vmem>>) attributes {dimension_semantics = [#tpu.dimension_semantics<parallel>, #tpu.dimension_semantics<arbitrary>], iteration_bounds = array<i64: 2, 2>, scalar_prefetch = 0 : i64, scratch_operands = 3 : i64, tpu.core_type = #tpu.core_type<tc>, window_params = [{transform_indices = @transform_0, window_bounds = array<i64: 1, 32, 32>}, {pipeline_mode = #tpu.pipeline_mode<synchronous>, transform_indices = @transform_1, window_bounds = array<i64: 1, 32>}, {pipeline_mode = #tpu.pipeline_mode<synchronous>, transform_indices = @transform_2, window_bounds = array<i64: 1, 32>}, {pipeline_mode = #tpu.pipeline_mode<synchronous>, transform_indices = @transform_3, window_bounds = array<i64: 32, 96>}, {pipeline_mode = #tpu.pipeline_mode<synchronous>, transform_indices = @transform_4, window_bounds = array<i64: 1, 96>}, {pipeline_mode = #tpu.pipeline_mode<synchronous>, transform_indices = @transform_5, window_bounds = array<i64: 32, 32>}, {pipeline_mode = #tpu.pipeline_mode<synchronous>, transform_indices = @transform_6, window_bounds = array<i64: 1, 32>}, {pipeline_mode = #tpu.pipeline_mode<synchronous>, transform_indices = @transform_7, window_bounds = array<i64: 1, 32>}, {pipeline_mode = #tpu.pipeline_mode<synchronous>, transform_indices = @transform_8, window_bounds = array<i64: 1, 32>}, {pipeline_mode = #tpu.pipeline_mode<synchronous>, transform_indices = @transform_9, window_bounds = array<i64: 32, 128>}, {pipeline_mode = #tpu.pipeline_mode<synchronous>, transform_indices = @transform_10, window_bounds = array<i64: 1, 128>}, {pipeline_mode = #tpu.pipeline_mode<synchronous>, transform_indices = @transform_11, window_bounds = array<i64: 128, 32>}, {pipeline_mode = #tpu.pipeline_mode<synchronous>, transform_indices = @transform_12, window_bounds = array<i64: 1, 32>}, {transform_indices = @transform_13, window_bounds = array<i64: 1, 16, 32>}]} {
    %c0_i32 = arith.constant 0 : i32
    %0 = arith.cmpi eq, %arg1, %c0_i32 : i32
    %1 = arith.extui %0 : i1 to i32
    %c0_i32_0 = arith.constant 0 : i32
    %2 = arith.cmpi ne, %1, %c0_i32_0 : i32
    scf.if %2 {
      %c0_40 = arith.constant 0 : index
      %c0_41 = arith.constant 0 : index
      %c0_42 = arith.constant 0 : index
      %94 = vector.load %arg2[%c0_40, %c0_41, %c0_42] : memref<1x32x32xf32, #tpu.memory_space<vmem>>, vector<1x32x32xf32>
      %95 = vector.shape_cast %94 : vector<1x32x32xf32> to vector<32x32xf32>
      %c0_43 = arith.constant 0 : index
      %c0_44 = arith.constant 0 : index
      %96 = vector.load %arg3[%c0_43, %c0_44] : memref<1x32xf32, #tpu.memory_space<vmem>>, vector<1x32xf32>
      %c0_45 = arith.constant 0 : index
      %c0_46 = arith.constant 0 : index
      %97 = vector.load %arg4[%c0_45, %c0_46] : memref<1x32xf32, #tpu.memory_space<vmem>>, vector<1x32xf32>
      %cst_47 = arith.constant dense<0.000000e+00> : vector<32xf32>
      %98 = vector.multi_reduction <add>, %95, %cst_47 [1] : vector<32x32xf32> to vector<32xf32>
      %99 = vector.shape_cast %98 : vector<32xf32> to vector<32x1xf32>
      %cst_48 = arith.constant 3.200000e+01 : f32
      %100 = vector.broadcast %cst_48 : f32 to vector<32x1xf32>
      %101 = arith.divf %99, %100 : vector<32x1xf32>
      %102 = vector.broadcast %101 : vector<32x1xf32> to vector<32x32xf32>
      %103 = arith.subf %95, %102 : vector<32x32xf32>
      %104 = arith.mulf %103, %103 : vector<32x32xf32>
      %cst_49 = arith.constant dense<0.000000e+00> : vector<32xf32>
      %105 = vector.multi_reduction <add>, %104, %cst_49 [1] : vector<32x32xf32> to vector<32xf32>
      %106 = vector.shape_cast %105 : vector<32xf32> to vector<32x1xf32>
      %cst_50 = arith.constant 3.200000e+01 : f32
      %107 = vector.broadcast %cst_50 : f32 to vector<32x1xf32>
      %108 = arith.divf %106, %107 : vector<32x1xf32>
      %109 = vector.broadcast %101 : vector<32x1xf32> to vector<32x32xf32>
      %110 = arith.subf %95, %109 : vector<32x32xf32>
      %cst_51 = arith.constant 9.99999974E-6 : f32
      %111 = vector.broadcast %cst_51 : f32 to vector<32x1xf32>
      %112 = arith.addf %108, %111 : vector<32x1xf32>
      %113 = math.rsqrt %112 : vector<32x1xf32>
      %114 = vector.broadcast %113 : vector<32x1xf32> to vector<32x32xf32>
      %115 = arith.mulf %110, %114 : vector<32x32xf32>
      %116 = vector.broadcast %96 : vector<1x32xf32> to vector<32x32xf32>
      %117 = arith.mulf %115, %116 : vector<32x32xf32>
      %118 = vector.broadcast %97 : vector<1x32xf32> to vector<32x32xf32>
      %119 = arith.addf %117, %118 : vector<32x32xf32>
      %120 = arith.truncf %119 : vector<32x32xf32> to vector<32x32xbf16>
      %c0_52 = arith.constant 0 : index
      %c0_53 = arith.constant 0 : index
      %121 = vector.load %arg5[%c0_52, %c0_53] : memref<32x96xbf16, #tpu.memory_space<vmem>>, vector<32x96xbf16>
      %cst_54 = arith.constant dense<0.000000e+00> : vector<32x96xf32>
      %122 = tpu.matmul %120, %121, %cst_54 {dimension_numbers = #tpu.dot_dimension_numbers<[1], [0], [0], [1], [0, 0, 1, 1], [], []>} : vector<32x32xbf16>, vector<32x96xbf16>, vector<32x96xf32> -> vector<32x96xf32>
      %c0_55 = arith.constant 0 : index
      %c0_56 = arith.constant 0 : index
      %123 = vector.load %arg6[%c0_55, %c0_56] : memref<1x96xf32, #tpu.memory_space<vmem>>, vector<1x96xf32>
      %124 = vector.broadcast %123 : vector<1x96xf32> to vector<32x96xf32>
      %125 = arith.addf %122, %124 : vector<32x96xf32>
      %126 = vector.extract_strided_slice %125 {offsets = [0, 0], sizes = [32, 8], strides = [1, 1]} : vector<32x96xf32> to vector<32x8xf32>
      %cst_57 = arith.constant 0.353553385 : f32
      %127 = vector.broadcast %cst_57 : f32 to vector<32x8xf32>
      %128 = arith.mulf %126, %127 : vector<32x8xf32>
      %129 = arith.truncf %128 : vector<32x8xf32> to vector<32x8xbf16>
      %c0_58 = arith.constant 0 : index
      %c0_59 = arith.constant 0 : index
      %c0_60 = arith.constant 0 : index
      %130 = vector.load %arg16[%c0_58, %c0_59, %c0_60] : memref<4x32x8xbf16, #tpu.memory_space<vmem>>, vector<1x32x8xbf16>
      %131 = vector.shape_cast %130 : vector<1x32x8xbf16> to vector<32x8xbf16>
      %132 = vector.shape_cast %129 : vector<32x8xbf16> to vector<1x32x8xbf16>
      tpu.vector_store %arg16[%c0_58, %c0_59, %c0_60], %132 {strides = array<i32>} : memref<4x32x8xbf16, #tpu.memory_space<vmem>>, vector<1x32x8xbf16>,
      %133 = vector.extract_strided_slice %125 {offsets = [0, 32], sizes = [32, 8], strides = [1, 1]} : vector<32x96xf32> to vector<32x8xf32>
      %134 = arith.truncf %133 : vector<32x8xf32> to vector<32x8xbf16>
      %c0_61 = arith.constant 0 : index
      %c0_62 = arith.constant 0 : index
      %c0_63 = arith.constant 0 : index
      %135 = vector.load %arg17[%c0_61, %c0_62, %c0_63] : memref<4x32x8xbf16, #tpu.memory_space<vmem>>, vector<1x32x8xbf16>
      %136 = vector.shape_cast %135 : vector<1x32x8xbf16> to vector<32x8xbf16>
      %137 = vector.shape_cast %134 : vector<32x8xbf16> to vector<1x32x8xbf16>
      tpu.vector_store %arg17[%c0_61, %c0_62, %c0_63], %137 {strides = array<i32>} : memref<4x32x8xbf16, #tpu.memory_space<vmem>>, vector<1x32x8xbf16>,
      %138 = vector.extract_strided_slice %125 {offsets = [0, 64], sizes = [32, 8], strides = [1, 1]} : vector<32x96xf32> to vector<32x8xf32>
      %139 = arith.truncf %138 : vector<32x8xf32> to vector<32x8xbf16>
      %c0_64 = arith.constant 0 : index
      %c0_65 = arith.constant 0 : index
      %c0_66 = arith.constant 0 : index
      %140 = vector.load %arg18[%c0_64, %c0_65, %c0_66] : memref<4x32x8xbf16, #tpu.memory_space<vmem>>, vector<1x32x8xbf16>
      %141 = vector.shape_cast %140 : vector<1x32x8xbf16> to vector<32x8xbf16>
      %142 = vector.shape_cast %139 : vector<32x8xbf16> to vector<1x32x8xbf16>
      tpu.vector_store %arg18[%c0_64, %c0_65, %c0_66], %142 {strides = array<i32>} : memref<4x32x8xbf16, #tpu.memory_space<vmem>>, vector<1x32x8xbf16>,
      %143 = vector.extract_strided_slice %125 {offsets = [0, 8], sizes = [32, 8], strides = [1, 1]} : vector<32x96xf32> to vector<32x8xf32>
      %cst_67 = arith.constant 0.353553385 : f32
      %144 = vector.broadcast %cst_67 : f32 to vector<32x8xf32>
      %145 = arith.mulf %143, %144 : vector<32x8xf32>
      %146 = arith.truncf %145 : vector<32x8xf32> to vector<32x8xbf16>
      %c1 = arith.constant 1 : index
      %c0_68 = arith.constant 0 : index
      %c0_69 = arith.constant 0 : index
      %147 = vector.load %arg16[%c1, %c0_68, %c0_69] : memref<4x32x8xbf16, #tpu.memory_space<vmem>>, vector<1x32x8xbf16>
      %148 = vector.shape_cast %147 : vector<1x32x8xbf16> to vector<32x8xbf16>
      %149 = vector.shape_cast %146 : vector<32x8xbf16> to vector<1x32x8xbf16>
      tpu.vector_store %arg16[%c1, %c0_68, %c0_69], %149 {strides = array<i32>} : memref<4x32x8xbf16, #tpu.memory_space<vmem>>, vector<1x32x8xbf16>,
      %150 = vector.extract_strided_slice %125 {offsets = [0, 40], sizes = [32, 8], strides = [1, 1]} : vector<32x96xf32> to vector<32x8xf32>
      %151 = arith.truncf %150 : vector<32x8xf32> to vector<32x8xbf16>
      %c1_70 = arith.constant 1 : index
      %c0_71 = arith.constant 0 : index
      %c0_72 = arith.constant 0 : index
      %152 = vector.load %arg17[%c1_70, %c0_71, %c0_72] : memref<4x32x8xbf16, #tpu.memory_space<vmem>>, vector<1x32x8xbf16>
      %153 = vector.shape_cast %152 : vector<1x32x8xbf16> to vector<32x8xbf16>
      %154 = vector.shape_cast %151 : vector<32x8xbf16> to vector<1x32x8xbf16>
      tpu.vector_store %arg17[%c1_70, %c0_71, %c0_72], %154 {strides = array<i32>} : memref<4x32x8xbf16, #tpu.memory_space<vmem>>, vector<1x32x8xbf16>,
      %155 = vector.extract_strided_slice %125 {offsets = [0, 72], sizes = [32, 8], strides = [1, 1]} : vector<32x96xf32> to vector<32x8xf32>
      %156 = arith.truncf %155 : vector<32x8xf32> to vector<32x8xbf16>
      %c1_73 = arith.constant 1 : index
      %c0_74 = arith.constant 0 : index
      %c0_75 = arith.constant 0 : index
      %157 = vector.load %arg18[%c1_73, %c0_74, %c0_75] : memref<4x32x8xbf16, #tpu.memory_space<vmem>>, vector<1x32x8xbf16>
      %158 = vector.shape_cast %157 : vector<1x32x8xbf16> to vector<32x8xbf16>
      %159 = vector.shape_cast %156 : vector<32x8xbf16> to vector<1x32x8xbf16>
      tpu.vector_store %arg18[%c1_73, %c0_74, %c0_75], %159 {strides = array<i32>} : memref<4x32x8xbf16, #tpu.memory_space<vmem>>, vector<1x32x8xbf16>,
      %160 = vector.extract_strided_slice %125 {offsets = [0, 16], sizes = [32, 8], strides = [1, 1]} : vector<32x96xf32> to vector<32x8xf32>
      %cst_76 = arith.constant 0.353553385 : f32
      %161 = vector.broadcast %cst_76 : f32 to vector<32x8xf32>
      %162 = arith.mulf %160, %161 : vector<32x8xf32>
      %163 = arith.truncf %162 : vector<32x8xf32> to vector<32x8xbf16>
      %c2 = arith.constant 2 : index
      %c0_77 = arith.constant 0 : index
      %c0_78 = arith.constant 0 : index
      %164 = vector.load %arg16[%c2, %c0_77, %c0_78] : memref<4x32x8xbf16, #tpu.memory_space<vmem>>, vector<1x32x8xbf16>
      %165 = vector.shape_cast %164 : vector<1x32x8xbf16> to vector<32x8xbf16>
      %166 = vector.shape_cast %163 : vector<32x8xbf16> to vector<1x32x8xbf16>
      tpu.vector_store %arg16[%c2, %c0_77, %c0_78], %166 {strides = array<i32>} : memref<4x32x8xbf16, #tpu.memory_space<vmem>>, vector<1x32x8xbf16>,
      %167 = vector.extract_strided_slice %125 {offsets = [0, 48], sizes = [32, 8], strides = [1, 1]} : vector<32x96xf32> to vector<32x8xf32>
      %168 = arith.truncf %167 : vector<32x8xf32> to vector<32x8xbf16>
      %c2_79 = arith.constant 2 : index
      %c0_80 = arith.constant 0 : index
      %c0_81 = arith.constant 0 : index
      %169 = vector.load %arg17[%c2_79, %c0_80, %c0_81] : memref<4x32x8xbf16, #tpu.memory_space<vmem>>, vector<1x32x8xbf16>
      %170 = vector.shape_cast %169 : vector<1x32x8xbf16> to vector<32x8xbf16>
      %171 = vector.shape_cast %168 : vector<32x8xbf16> to vector<1x32x8xbf16>
      tpu.vector_store %arg17[%c2_79, %c0_80, %c0_81], %171 {strides = array<i32>} : memref<4x32x8xbf16, #tpu.memory_space<vmem>>, vector<1x32x8xbf16>,
      %172 = vector.extract_strided_slice %125 {offsets = [0, 80], sizes = [32, 8], strides = [1, 1]} : vector<32x96xf32> to vector<32x8xf32>
      %173 = arith.truncf %172 : vector<32x8xf32> to vector<32x8xbf16>
      %c2_82 = arith.constant 2 : index
      %c0_83 = arith.constant 0 : index
      %c0_84 = arith.constant 0 : index
      %174 = vector.load %arg18[%c2_82, %c0_83, %c0_84] : memref<4x32x8xbf16, #tpu.memory_space<vmem>>, vector<1x32x8xbf16>
      %175 = vector.shape_cast %174 : vector<1x32x8xbf16> to vector<32x8xbf16>
      %176 = vector.shape_cast %173 : vector<32x8xbf16> to vector<1x32x8xbf16>
      tpu.vector_store %arg18[%c2_82, %c0_83, %c0_84], %176 {strides = array<i32>} : memref<4x32x8xbf16, #tpu.memory_space<vmem>>, vector<1x32x8xbf16>,
      %177 = vector.extract_strided_slice %125 {offsets = [0, 24], sizes = [32, 8], strides = [1, 1]} : vector<32x96xf32> to vector<32x8xf32>
      %cst_85 = arith.constant 0.353553385 : f32
      %178 = vector.broadcast %cst_85 : f32 to vector<32x8xf32>
      %179 = arith.mulf %177, %178 : vector<32x8xf32>
      %180 = arith.truncf %179 : vector<32x8xf32> to vector<32x8xbf16>
      %c3 = arith.constant 3 : index
      %c0_86 = arith.constant 0 : index
      %c0_87 = arith.constant 0 : index
      %181 = vector.load %arg16[%c3, %c0_86, %c0_87] : memref<4x32x8xbf16, #tpu.memory_space<vmem>>, vector<1x32x8xbf16>
      %182 = vector.shape_cast %181 : vector<1x32x8xbf16> to vector<32x8xbf16>
      %183 = vector.shape_cast %180 : vector<32x8xbf16> to vector<1x32x8xbf16>
      tpu.vector_store %arg16[%c3, %c0_86, %c0_87], %183 {strides = array<i32>} : memref<4x32x8xbf16, #tpu.memory_space<vmem>>, vector<1x32x8xbf16>,
      %184 = vector.extract_strided_slice %125 {offsets = [0, 56], sizes = [32, 8], strides = [1, 1]} : vector<32x96xf32> to vector<32x8xf32>
      %185 = arith.truncf %184 : vector<32x8xf32> to vector<32x8xbf16>
      %c3_88 = arith.constant 3 : index
      %c0_89 = arith.constant 0 : index
      %c0_90 = arith.constant 0 : index
      %186 = vector.load %arg17[%c3_88, %c0_89, %c0_90] : memref<4x32x8xbf16, #tpu.memory_space<vmem>>, vector<1x32x8xbf16>
      %187 = vector.shape_cast %186 : vector<1x32x8xbf16> to vector<32x8xbf16>
      %188 = vector.shape_cast %185 : vector<32x8xbf16> to vector<1x32x8xbf16>
      tpu.vector_store %arg17[%c3_88, %c0_89, %c0_90], %188 {strides = array<i32>} : memref<4x32x8xbf16, #tpu.memory_space<vmem>>, vector<1x32x8xbf16>,
      %189 = vector.extract_strided_slice %125 {offsets = [0, 88], sizes = [32, 8], strides = [1, 1]} : vector<32x96xf32> to vector<32x8xf32>
      %190 = arith.truncf %189 : vector<32x8xf32> to vector<32x8xbf16>
      %c3_91 = arith.constant 3 : index
      %c0_92 = arith.constant 0 : index
      %c0_93 = arith.constant 0 : index
      %191 = vector.load %arg18[%c3_91, %c0_92, %c0_93] : memref<4x32x8xbf16, #tpu.memory_space<vmem>>, vector<1x32x8xbf16>
      %192 = vector.shape_cast %191 : vector<1x32x8xbf16> to vector<32x8xbf16>
      %193 = vector.shape_cast %190 : vector<32x8xbf16> to vector<1x32x8xbf16>
      tpu.vector_store %arg18[%c3_91, %c0_92, %c0_93], %193 {strides = array<i32>} : memref<4x32x8xbf16, #tpu.memory_space<vmem>>, vector<1x32x8xbf16>,
    } else {
    }
    %c16_i32 = arith.constant 16 : i32
    %3 = arith.muli %arg1, %c16_i32 : i32
    %4 = tpu.assume_multiple %3, 16 : i32
    %c0 = arith.constant 0 : index
    %5 = arith.index_cast %4 : i32 to index
    %c0_1 = arith.constant 0 : index
    %6 = vector.load %arg16[%c0, %5, %c0_1] : memref<4x32x8xbf16, #tpu.memory_space<vmem>>, vector<4x16x8xbf16>
    %7 = tpu.iota {dimensions = array<i32: 0>} : vector<16x16xi32>
    %8 = vector.broadcast %4 : i32 to vector<16x16xi32>
    %9 = arith.addi %8, %7 : vector<16x16xi32>
    %cst = arith.constant 0xFF800000 : f32
    %10 = vector.broadcast %cst : f32 to vector<4x16x1xf32>
    %cst_2 = arith.constant 0.000000e+00 : f32
    %11 = vector.broadcast %cst_2 : f32 to vector<4x16x1xf32>
    %cst_3 = arith.constant 0.000000e+00 : f32
    %12 = vector.broadcast %cst_3 : f32 to vector<4x16x8xf32>
    %c1_i32 = arith.constant 1 : i32
    %13 = arith.addi %arg1, %c1_i32 : i32
    %c0_i32_4 = arith.constant 0 : i32
    %14 = arith.subi %13, %c0_i32_4 : i32
    %15 = arith.addi %c0_i32_4, %14 : i32
    %c1_i32_5 = arith.constant 1 : i32
    %16:3 = scf.for %arg19 = %c0_i32_4 to %15 step %c1_i32_5 iter_args(%arg20 = %10, %arg21 = %11, %arg22 = %12) -> (vector<4x16x1xf32>, vector<4x16x1xf32>, vector<4x16x8xf32>)  : i32 {
      %c16_i32_40 = arith.constant 16 : i32
      %94 = arith.muli %arg19, %c16_i32_40 : i32
      %95 = tpu.assume_multiple %94, 16 : i32
      %c0_41 = arith.constant 0 : index
      %96 = arith.index_cast %95 : i32 to index
      %c0_42 = arith.constant 0 : index
      %97 = vector.load %arg17[%c0_41, %96, %c0_42] : memref<4x32x8xbf16, #tpu.memory_space<vmem>>, vector<4x16x8xbf16>
      %c0_43 = arith.constant 0 : index
      %98 = arith.index_cast %95 : i32 to index
      %c0_44 = arith.constant 0 : index
      %99 = vector.load %arg18[%c0_43, %98, %c0_44] : memref<4x32x8xbf16, #tpu.memory_space<vmem>>, vector<4x16x8xbf16>
      "tpu.trace_start"() <{level = 10 : i32, message = "htd,hsd->hts"}> : () -> ()
      %cst_45 = arith.constant dense<0.000000e+00> : vector<4x16x16xf32>
      %100 = tpu.matmul %6, %97, %cst_45 {dimension_numbers = #tpu.dot_dimension_numbers<[2], [2], [1], [1], [0, 0, 0, 1, 1, 1], [0], [0]>} : vector<4x16x8xbf16>, vector<4x16x8xbf16>, vector<4x16x16xf32> -> vector<4x16x16xf32>
      "tpu.trace_stop"() : () -> ()
      %101 = tpu.iota {dimensions = array<i32: 1>} : vector<16x16xi32>
      %102 = vector.broadcast %95 : i32 to vector<16x16xi32>
      %103 = arith.addi %102, %101 : vector<16x16xi32>
      %104 = arith.cmpi sle, %103, %9 : vector<16x16xi32>
      %105 = vector.shape_cast %104 : vector<16x16xi1> to vector<1x16x16xi1>
      %cst_46 = arith.constant -1.000000e+30 : f32
      %106 = vector.shape_cast %105 : vector<1x16x16xi1> to vector<1x16x16xi1>
      %107 = vector.broadcast %106 : vector<1x16x16xi1> to vector<4x16x16xi1>
      %108 = vector.broadcast %cst_46 : f32 to vector<4x16x16xf32>
      %109 = arith.select %107, %100, %108 : vector<4x16x16xi1>, vector<4x16x16xf32>
      %cst_47 = arith.constant dense<0xFF800000> : vector<4x16xf32>
      %110 = vector.multi_reduction <maximumf>, %109, %cst_47 [2] : vector<4x16x16xf32> to vector<4x16xf32>
      %111 = vector.shape_cast %110 : vector<4x16xf32> to vector<4x16x1xf32>
      %112 = arith.maximumf %arg20, %111 : vector<4x16x1xf32>
      %113 = arith.subf %arg20, %112 : vector<4x16x1xf32>
      %114 = math.exp %113 : vector<4x16x1xf32>
      %115 = vector.broadcast %112 : vector<4x16x1xf32> to vector<4x16x16xf32>
      %116 = arith.subf %109, %115 : vector<4x16x16xf32>
      %117 = math.exp %116 : vector<4x16x16xf32>
      %118 = arith.mulf %114, %arg21 : vector<4x16x1xf32>
      %cst_48 = arith.constant dense<0.000000e+00> : vector<4x16xf32>
      %119 = vector.multi_reduction <add>, %117, %cst_48 [2] : vector<4x16x16xf32> to vector<4x16xf32>
      %120 = vector.shape_cast %119 : vector<4x16xf32> to vector<4x16x1xf32>
      %121 = arith.addf %118, %120 : vector<4x16x1xf32>
      %122 = vector.broadcast %114 : vector<4x16x1xf32> to vector<4x16x8xf32>
      %123 = arith.mulf %122, %arg22 : vector<4x16x8xf32>
      %124 = arith.truncf %117 : vector<4x16x16xf32> to vector<4x16x16xbf16>
      "tpu.trace_start"() <{level = 10 : i32, message = "hts,hsd->htd"}> : () -> ()
      %cst_49 = arith.constant dense<0.000000e+00> : vector<4x16x8xf32>
      %125 = tpu.matmul %124, %99, %cst_49 {dimension_numbers = #tpu.dot_dimension_numbers<[2], [1], [1], [2], [0, 0, 0, 1, 1, 2], [0], [0]>} : vector<4x16x16xbf16>, vector<4x16x8xbf16>, vector<4x16x8xf32> -> vector<4x16x8xf32>
      "tpu.trace_stop"() : () -> ()
      %126 = arith.addf %123, %125 : vector<4x16x8xf32>
      scf.yield %112, %121, %126 : vector<4x16x1xf32>, vector<4x16x1xf32>, vector<4x16x8xf32>
    }
    %17 = tpu.reciprocal %16#1 {approx = true} : vector<4x16x1xf32> -> vector<4x16x1xf32>
    %18 = vector.broadcast %17 : vector<4x16x1xf32> to vector<4x16x8xf32>
    %19 = arith.mulf %16#2, %18 : vector<4x16x8xf32>
    %20 = vector.extract_strided_slice %19 {offsets = [0, 0, 0], sizes = [1, 16, 8], strides = [1, 1, 1]} : vector<4x16x8xf32> to vector<1x16x8xf32>
    %21 = vector.shape_cast %20 : vector<1x16x8xf32> to vector<16x8xf32>
    %22 = vector.extract_strided_slice %19 {offsets = [1, 0, 0], sizes = [1, 16, 8], strides = [1, 1, 1]} : vector<4x16x8xf32> to vector<1x16x8xf32>
    %23 = vector.shape_cast %22 : vector<1x16x8xf32> to vector<16x8xf32>
    %24 = vector.extract_strided_slice %19 {offsets = [2, 0, 0], sizes = [1, 16, 8], strides = [1, 1, 1]} : vector<4x16x8xf32> to vector<1x16x8xf32>
    %25 = vector.shape_cast %24 : vector<1x16x8xf32> to vector<16x8xf32>
    %26 = vector.extract_strided_slice %19 {offsets = [3, 0, 0], sizes = [1, 16, 8], strides = [1, 1, 1]} : vector<4x16x8xf32> to vector<1x16x8xf32>
    %27 = vector.shape_cast %26 : vector<1x16x8xf32> to vector<16x8xf32>
    %28 = tpu.concatenate %21, %23, %25, %27 in 1 : vector<16x8xf32>, vector<16x8xf32>, vector<16x8xf32>, vector<16x8xf32> -> vector<16x32xf32>
    %29 = arith.truncf %28 : vector<16x32xf32> to vector<16x32xbf16>
    %c0_6 = arith.constant 0 : index
    %c0_7 = arith.constant 0 : index
    %30 = vector.load %arg7[%c0_6, %c0_7] : memref<32x32xbf16, #tpu.memory_space<vmem>>, vector<32x32xbf16>
    %cst_8 = arith.constant dense<0.000000e+00> : vector<16x32xf32>
    %31 = tpu.matmul %29, %30, %cst_8 {dimension_numbers = #tpu.dot_dimension_numbers<[1], [0], [0], [1], [0, 0, 1, 1], [], []>} : vector<16x32xbf16>, vector<32x32xbf16>, vector<16x32xf32> -> vector<16x32xf32>
    %c0_9 = arith.constant 0 : index
    %c0_10 = arith.constant 0 : index
    %32 = vector.load %arg8[%c0_9, %c0_10] : memref<1x32xf32, #tpu.memory_space<vmem>>, vector<1x32xf32>
    %33 = vector.broadcast %32 : vector<1x32xf32> to vector<16x32xf32>
    %34 = arith.addf %31, %33 : vector<16x32xf32>
    %c0_11 = arith.constant 0 : index
    %35 = arith.index_cast %4 : i32 to index
    %c0_12 = arith.constant 0 : index
    %36 = vector.load %arg2[%c0_11, %35, %c0_12] : memref<1x32x32xf32, #tpu.memory_space<vmem>>, vector<1x16x32xf32>
    %37 = vector.shape_cast %36 : vector<1x16x32xf32> to vector<16x32xf32>
    %38 = arith.addf %37, %34 : vector<16x32xf32>
    %c0_13 = arith.constant 0 : index
    %c0_14 = arith.constant 0 : index
    %39 = vector.load %arg9[%c0_13, %c0_14] : memref<1x32xf32, #tpu.memory_space<vmem>>, vector<1x32xf32>
    %c0_15 = arith.constant 0 : index
    %c0_16 = arith.constant 0 : index
    %40 = vector.load %arg10[%c0_15, %c0_16] : memref<1x32xf32, #tpu.memory_space<vmem>>, vector<1x32xf32>
    %cst_17 = arith.constant dense<0.000000e+00> : vector<16xf32>
    %41 = vector.multi_reduction <add>, %38, %cst_17 [1] : vector<16x32xf32> to vector<16xf32>
    %42 = vector.shape_cast %41 : vector<16xf32> to vector<16x1xf32>
    %cst_18 = arith.constant 3.200000e+01 : f32
    %43 = vector.broadcast %cst_18 : f32 to vector<16x1xf32>
    %44 = arith.divf %42, %43 : vector<16x1xf32>
    %45 = vector.broadcast %44 : vector<16x1xf32> to vector<16x32xf32>
    %46 = arith.subf %38, %45 : vector<16x32xf32>
    %47 = arith.mulf %46, %46 : vector<16x32xf32>
    %cst_19 = arith.constant dense<0.000000e+00> : vector<16xf32>
    %48 = vector.multi_reduction <add>, %47, %cst_19 [1] : vector<16x32xf32> to vector<16xf32>
    %49 = vector.shape_cast %48 : vector<16xf32> to vector<16x1xf32>
    %cst_20 = arith.constant 3.200000e+01 : f32
    %50 = vector.broadcast %cst_20 : f32 to vector<16x1xf32>
    %51 = arith.divf %49, %50 : vector<16x1xf32>
    %52 = vector.broadcast %44 : vector<16x1xf32> to vector<16x32xf32>
    %53 = arith.subf %38, %52 : vector<16x32xf32>
    %cst_21 = arith.constant 9.99999974E-6 : f32
    %54 = vector.broadcast %cst_21 : f32 to vector<16x1xf32>
    %55 = arith.addf %51, %54 : vector<16x1xf32>
    %56 = math.rsqrt %55 : vector<16x1xf32>
    %57 = vector.broadcast %56 : vector<16x1xf32> to vector<16x32xf32>
    %58 = arith.mulf %53, %57 : vector<16x32xf32>
    %59 = vector.broadcast %39 : vector<1x32xf32> to vector<16x32xf32>
    %60 = arith.mulf %58, %59 : vector<16x32xf32>
    %61 = vector.broadcast %40 : vector<1x32xf32> to vector<16x32xf32>
    %62 = arith.addf %60, %61 : vector<16x32xf32>
    %63 = arith.truncf %62 : vector<16x32xf32> to vector<16x32xbf16>
    %cst_22 = arith.constant 0.000000e+00 : f32
    %64 = vector.broadcast %cst_22 : f32 to vector<16x32xf32>
    %c0_23 = arith.constant 0 : index
    %c0_24 = arith.constant 0 : index
    %65 = vector.load %arg11[%c0_23, %c0_24] : memref<32x128xbf16, #tpu.memory_space<vmem>>, vector<32x128xbf16>
    %cst_25 = arith.constant dense<0.000000e+00> : vector<16x128xf32>
    %66 = tpu.matmul %63, %65, %cst_25 {dimension_numbers = #tpu.dot_dimension_numbers<[1], [0], [0], [1], [0, 0, 1, 1], [], []>} : vector<16x32xbf16>, vector<32x128xbf16>, vector<16x128xf32> -> vector<16x128xf32>
    %c0_26 = arith.constant 0 : index
    %c0_27 = arith.constant 0 : index
    %67 = vector.load %arg12[%c0_26, %c0_27] : memref<1x128xf32, #tpu.memory_space<vmem>>, vector<1x128xf32>
    %68 = vector.broadcast %67 : vector<1x128xf32> to vector<16x128xf32>
    %69 = arith.addf %66, %68 : vector<16x128xf32>
    %cst_28 = arith.constant 5.000000e-01 : f32
    %70 = vector.broadcast %cst_28 : f32 to vector<16x128xf32>
    %71 = arith.mulf %70, %69 : vector<16x128xf32>
    %cst_29 = arith.constant 4.471500e-02 : f32
    %72 = vector.broadcast %cst_29 : f32 to vector<16x128xf32>
    %73 = arith.mulf %72, %69 : vector<16x128xf32>
    %74 = arith.mulf %73, %69 : vector<16x128xf32>
    %75 = arith.mulf %74, %69 : vector<16x128xf32>
    %76 = arith.addf %69, %75 : vector<16x128xf32>
    %cst_30 = arith.constant 0.797884583 : f32
    %77 = vector.broadcast %cst_30 : f32 to vector<16x128xf32>
    %78 = arith.mulf %77, %76 : vector<16x128xf32>
    %79 = math.tanh %78 : vector<16x128xf32>
    %cst_31 = arith.constant 1.000000e+00 : f32
    %80 = vector.broadcast %cst_31 : f32 to vector<16x128xf32>
    %81 = arith.addf %80, %79 : vector<16x128xf32>
    %82 = arith.mulf %71, %81 : vector<16x128xf32>
    %83 = arith.truncf %82 : vector<16x128xf32> to vector<16x128xbf16>
    %c0_32 = arith.constant 0 : index
    %c0_33 = arith.constant 0 : index
    %84 = vector.load %arg13[%c0_32, %c0_33] : memref<128x32xbf16, #tpu.memory_space<vmem>>, vector<128x32xbf16>
    %cst_34 = arith.constant dense<0.000000e+00> : vector<16x32xf32>
    %85 = tpu.matmul %83, %84, %cst_34 {dimension_numbers = #tpu.dot_dimension_numbers<[1], [0], [0], [1], [0, 0, 1, 1], [], []>} : vector<16x128xbf16>, vector<128x32xbf16>, vector<16x32xf32> -> vector<16x32xf32>
    %86 = arith.addf %64, %85 : vector<16x32xf32>
    %c0_35 = arith.constant 0 : index
    %c0_36 = arith.constant 0 : index
    %87 = vector.load %arg14[%c0_35, %c0_36] : memref<1x32xf32, #tpu.memory_space<vmem>>, vector<1x32xf32>
    %88 = vector.broadcast %87 : vector<1x32xf32> to vector<16x32xf32>
    %89 = arith.addf %86, %88 : vector<16x32xf32>
    %90 = arith.addf %38, %89 : vector<16x32xf32>
    %c0_37 = arith.constant 0 : index
    %c0_38 = arith.constant 0 : index
    %c0_39 = arith.constant 0 : index
    %91 = vector.load %arg15[%c0_37, %c0_38, %c0_39] : memref<1x16x32xf32, #tpu.memory_space<vmem>>, vector<1x16x32xf32>
    %92 = vector.shape_cast %91 : vector<1x16x32xf32> to vector<16x32xf32>
    %93 = vector.shape_cast %90 : vector<16x32xf32> to vector<1x16x32xf32>
    tpu.vector_store %arg15[%c0_37, %c0_38, %c0_39], %93 {strides = array<i32>} : memref<1x16x32xf32, #tpu.memory_space<vmem>>, vector<1x16x32xf32>,
    return
  }
  func.func @transform_0(%arg0: i32, %arg1: i32) -> (i32, i32, i32) {
    %c0_i32 = arith.constant 0 : i32
    %c0_i32_0 = arith.constant 0 : i32
    %c0_i32_1 = arith.constant 0 : i32
    return %arg0, %c0_i32, %c0_i32_0 : i32, i32, i32
  }
  func.func @transform_1(%arg0: i32, %arg1: i32) -> (i32, i32) {
    %c0_i32 = arith.constant 0 : i32
    %c0_i32_0 = arith.constant 0 : i32
    %c0_i32_1 = arith.constant 0 : i32
    return %c0_i32, %c0_i32_0 : i32, i32
  }
  func.func @transform_2(%arg0: i32, %arg1: i32) -> (i32, i32) {
    %c0_i32 = arith.constant 0 : i32
    %c0_i32_0 = arith.constant 0 : i32
    %c0_i32_1 = arith.constant 0 : i32
    return %c0_i32, %c0_i32_0 : i32, i32
  }
  func.func @transform_3(%arg0: i32, %arg1: i32) -> (i32, i32) {
    %c0_i32 = arith.constant 0 : i32
    %c0_i32_0 = arith.constant 0 : i32
    %c0_i32_1 = arith.constant 0 : i32
    return %c0_i32, %c0_i32_0 : i32, i32
  }
  func.func @transform_4(%arg0: i32, %arg1: i32) -> (i32, i32) {
    %c0_i32 = arith.constant 0 : i32
    %c0_i32_0 = arith.constant 0 : i32
    %c0_i32_1 = arith.constant 0 : i32
    return %c0_i32, %c0_i32_0 : i32, i32
  }
  func.func @transform_5(%arg0: i32, %arg1: i32) -> (i32, i32) {
    %c0_i32 = arith.constant 0 : i32
    %c0_i32_0 = arith.constant 0 : i32
    %c0_i32_1 = arith.constant 0 : i32
    return %c0_i32, %c0_i32_0 : i32, i32
  }
  func.func @transform_6(%arg0: i32, %arg1: i32) -> (i32, i32) {
    %c0_i32 = arith.constant 0 : i32
    %c0_i32_0 = arith.constant 0 : i32
    %c0_i32_1 = arith.constant 0 : i32
    return %c0_i32, %c0_i32_0 : i32, i32
  }
  func.func @transform_7(%arg0: i32, %arg1: i32) -> (i32, i32) {
    %c0_i32 = arith.constant 0 : i32
    %c0_i32_0 = arith.constant 0 : i32
    %c0_i32_1 = arith.constant 0 : i32
    return %c0_i32, %c0_i32_0 : i32, i32
  }
  func.func @transform_8(%arg0: i32, %arg1: i32) -> (i32, i32) {
    %c0_i32 = arith.constant 0 : i32
    %c0_i32_0 = arith.constant 0 : i32
    %c0_i32_1 = arith.constant 0 : i32
    return %c0_i32, %c0_i32_0 : i32, i32
  }
  func.func @transform_9(%arg0: i32, %arg1: i32) -> (i32, i32) {
    %c0_i32 = arith.constant 0 : i32
    %c0_i32_0 = arith.constant 0 : i32
    %c0_i32_1 = arith.constant 0 : i32
    return %c0_i32, %c0_i32_0 : i32, i32
  }
  func.func @transform_10(%arg0: i32, %arg1: i32) -> (i32, i32) {
    %c0_i32 = arith.constant 0 : i32
    %c0_i32_0 = arith.constant 0 : i32
    %c0_i32_1 = arith.constant 0 : i32
    return %c0_i32, %c0_i32_0 : i32, i32
  }
  func.func @transform_11(%arg0: i32, %arg1: i32) -> (i32, i32) {
    %c0_i32 = arith.constant 0 : i32
    %c0_i32_0 = arith.constant 0 : i32
    %c0_i32_1 = arith.constant 0 : i32
    return %c0_i32, %c0_i32_0 : i32, i32
  }
  func.func @transform_12(%arg0: i32, %arg1: i32) -> (i32, i32) {
    %c0_i32 = arith.constant 0 : i32
    %c0_i32_0 = arith.constant 0 : i32
    %c0_i32_1 = arith.constant 0 : i32
    return %c0_i32, %c0_i32_0 : i32, i32
  }
  func.func @transform_13(%arg0: i32, %arg1: i32) -> (i32, i32, i32) {
    %c0_i32 = arith.constant 0 : i32
    %c0_i32_0 = arith.constant 0 : i32
    return %arg0, %arg1, %c0_i32 : i32, i32, i32
  }
}

</mosaic_0001>

<llo_original>
// kernel: tpu_custom_call.1
$region0: #{tpu_custom_call.1}
  #allocation0 [shape = 'u32[]', space=smem, size = 0x4, offset = 0x4, fixed_abs, tag = 'smem constant byte address 0x4 - core index']
  #allocation1 [shape = 'u32[72,128]{1,0:T(1,128)}', space=vmem, size = 0x9000, scoped, tag = 'internal scratch']
  #allocation2 [shape = 'bf16[4,32,8]{2,1,0:T(8,128)(2,1)}', space=vmem, size = 0x8000, scoped, tag = 'scratch operand']
  #allocation3 [shape = 'bf16[4,32,8]{2,1,0:T(8,128)(2,1)}', space=vmem, size = 0x8000, scoped, tag = 'scratch operand']
  #allocation4 [shape = 'bf16[4,32,8]{2,1,0:T(8,128)(2,1)}', space=vmem, size = 0x8000, scoped, tag = 'scratch operand']
  %s0 = inlined_call_operand.vmem [shape: f32[2,32,32], index: 0, kind: input, shape index: {}]
  %s1 = inlined_call_operand.hbm [shape: f32[1,32], index: 1, kind: input, shape index: {}]
  %s2 = inlined_call_operand.vmem [shape: f32[1,32], index: 2, kind: input, shape index: {}]
  %s3 = inlined_call_operand.vmem [shape: bf16[32,96], index: 3, kind: input, shape index: {}]
  %s4 = inlined_call_operand.vmem [shape: f32[1,96], index: 4, kind: input, shape index: {}]
  %s5 = inlined_call_operand.hbm [shape: bf16[32,32], index: 5, kind: input, shape index: {}]
  %s6 = inlined_call_operand.vmem [shape: f32[1,32], index: 6, kind: input, shape index: {}]
  %s7 = inlined_call_operand.vmem [shape: f32[1,32], index: 7, kind: input, shape index: {}]
  %s8 = inlined_call_operand.vmem [shape: f32[1,32], index: 8, kind: input, shape index: {}]
  %s9 = inlined_call_operand.hbm [shape: bf16[32,128], index: 9, kind: input, shape index: {}]
  %s10 = inlined_call_operand.vmem [shape: f32[1,128], index: 10, kind: input, shape index: {}]
  %s11 = inlined_call_operand.vmem [shape: bf16[128,32], index: 11, kind: input, shape index: {}]
  %s12 = inlined_call_operand.vmem [shape: f32[1,32], index: 12, kind: input, shape index: {}]
  %s13 = inlined_call_operand.hbm [shape: f32[2,32,32], index: 13, kind: output, shape index: {}]
  %s14 = sld [smem:[#allocation0]]
  $region108: #{tpu_custom_call.1} parent=0
    _
  %s16 = ssub.s32 1, %s14
  %s17 = scalar_select 0, %s16, %s14
  $region1: #{tpu_custom_call.1} parent=0
    #allocation5 [shape = 'u8[512]{0}', space=vmem, size = 0x400, scoped, tag = 'input window, operand 1, single buffered']
    #allocation6 [shape = 's32[2]{0}', space=sflag, size = 0x8, scoped, tag = 'scoped memory for tpu_custom_call.1']
    #allocation7 [shape = 's32[2]{0}', space=sflag, size = 0x8, scoped, tag = 'scoped memory for tpu_custom_call.1']
    #allocation8 [shape = 'u8[8192]{0}', space=vmem, size = 0x2000, scoped, tag = 'input window, operand 5, single buffered']
    #allocation9 [shape = 's32[1]{0}', space=sflag, size = 0x4, scoped, tag = 'scoped memory for tpu_custom_call.1']
    #allocation10 [shape = 'u8[8192]{0}', space=vmem, size = 0x2000, scoped, tag = 'input window, operand 9, single buffered']
    #allocation11 [shape = 'u8[16384]{0}', space=vmem, size = 0x4000, scoped, tag = 'output window, operand 0']
    %18 = vsyncpa [#allocation6], 0
    %19 = vsyncpa [#allocation9], 0
    %20 = vsyncpa [#allocation7], 0
    %s21 = scalar_lea.sflag [#allocation7], 1
    %22 = vsyncpa %s21, 0
    loop: start=0, step=1, limit=6
    $region2: #{tpu_custom_call.1} parent=1 // loop_pre_header
      _
    $region3: #{tpu_custom_call.1} parent=1 // loop_header
      %s24 = sphi 0, %s28
      %p25 = scmp.ge.s32.totalorder %s24, 6
      %s31 = sphi 0, %s43
      %s32 = sphi 0, %s39
      %s33 = sphi 0, %s31
      %s34 = sphi 0, %s32
      %s35 = sphi 0, %s33
      %s36 = sphi 0, %s34
      %s46 = sphi 0, %s48
      %s49 = sphi 0, %s46
      %s50 = sphi 0, %s49
      %s66 = sphi 0, %s50
      %s70 = sphi 0, %s70
      %s72 = sphi 0, %s70
      %s73 = sphi 0, %s72
      %s87 = sphi 0, %s73
      %s91 = sphi 0, %s91
      %s93 = sphi 0, %s91
      %s94 = sphi 0, %s93
      %s108 = sphi 0, %s94
      %s112 = sphi 0, %s112
      %s114 = sphi 0, %s112
      %s115 = sphi 0, %s114
      %s129 = sphi 0, %s115
      %s133 = sphi 0, %s133
      %s135 = sphi 0, %s133
      %s136 = sphi 0, %s135
      %s150 = sphi 0, %s136
      %s154 = sphi 0, %s154
      %s156 = sphi 0, %s154
      %s157 = sphi 0, %s156
      %s171 = sphi 0, %s157
      %s175 = sphi 0, %s175
      %s177 = sphi 0, %s175
      %s178 = sphi 0, %s177
      %s192 = sphi 0, %s178
      %s196 = sphi 0, %s196
      %s198 = sphi 0, %s196
      %s199 = sphi 0, %s198
      %s213 = sphi 0, %s199
      %s217 = sphi 0, %s217
      %s219 = sphi 0, %s217
      %s220 = sphi 0, %s219
      %s234 = sphi 0, %s220
      %s238 = sphi 0, %s238
      %s240 = sphi 0, %s238
      %s241 = sphi 0, %s240
      %s255 = sphi 0, %s241
      %s259 = sphi 0, %s259
      %s261 = sphi 0, %s259
      %s262 = sphi 0, %s261
      %s276 = sphi 0, %s262
      %s280 = sphi 0, %s280
      %s282 = sphi 0, %s280
      %s283 = sphi 0, %s282
      %s297 = sphi 0, %s283
      %s301 = sphi 0, %s301
      %s303 = sphi 0, %s301
      %s304 = sphi 0, %s303
      %s318 = sphi 0, %s304
      %s326 = sphi 0, %s328
      %s329 = sphi 0, %s326
      %s330 = sphi 0, %s329
      %s346 = sphi 0, %s330
    $region4: #{tpu_custom_call.1} parent=1 // loop_header_branch
      %27 = sbr.rel (%p25) target = $region8
    $region5: #{tpu_custom_call.1} parent=1 // loop_body
      %s29 = ssub.s32 %s24, 1
      %s30 = ssub.s32 %s24, 2
      %s37 = sadd.s32 1, %s32
      %p38 = scmp.ge.s32.totalorder %s37, 2
      %s39 = scalar_select %p38, 0, %s37
      %s40 = sadd.s32 1, %s31
      %s41 = scalar_select %p38, %s40, %s31
      %p42 = scmp.ge.s32.totalorder %s41, 2
      %s43 = scalar_select %p42, 0, %s41
      %s44 = ssub.s32 %s31, %s43
      %p45 = scmp.eq.s32.totalorder %s44, 0
      %s47 = sadd.s32 %s46, 1
      %s48 = scalar_select %p45, %s46, %s47
      %p51 = pneg %p45
      %p52 = scmp.eq.s32.totalorder %s24, 3
      %p53 = por %p51, %p52
      %p54 = scmp.ne.s32.totalorder %s46, %s49
      %p55 = scmp.eq.s32.totalorder %s24, 0
      %p56 = por %p54, %p55
      %p57 = scmp.ne.s32.totalorder %s46, %s49
      %p58 = scmp.eq.s32.totalorder %s29, 3
      %p59 = por %p57, %p58
      %p60 = scmp.ne.s32.totalorder %s49, %s50
      %p61 = scmp.eq.s32.totalorder %s29, 0
      %p62 = por %p60, %p61
      %p63 = scmp.ne.s32.totalorder %s49, %s50
      %p64 = scmp.eq.s32.totalorder %s30, 3
      %p65 = por %p63, %p64
      %p67 = scmp.ne.s32.totalorder %s50, %s66
      %p68 = scmp.eq.s32.totalorder %s30, 0
      %p69 = por %p67, %p68
      %s71 = sadd.s32 %s70, 1
      %p74 = scmp.eq.s32.totalorder %s24, 3
      %p75 = scmp.ne.s32.totalorder %s70, %s72
      %p76 = scmp.eq.s32.totalorder %s24, 0
      %p77 = por %p75, %p76
      %p78 = scmp.ne.s32.totalorder %s70, %s72
      %p79 = scmp.eq.s32.totalorder %s29, 3
      %p80 = por %p78, %p79
      %p81 = scmp.ne.s32.totalorder %s72, %s73
      %p82 = scmp.eq.s32.totalorder %s29, 0
      %p83 = por %p81, %p82
      %p84 = scmp.ne.s32.totalorder %s72, %s73
      %p85 = scmp.eq.s32.totalorder %s30, 3
      %p86 = por %p84, %p85
      %p88 = scmp.ne.s32.totalorder %s73, %s87
      %p89 = scmp.eq.s32.totalorder %s30, 0
      %p90 = por %p88, %p89
      %s92 = sadd.s32 %s91, 1
      %p95 = scmp.eq.s32.totalorder %s24, 3
      %p96 = scmp.ne.s32.totalorder %s91, %s93
      %p97 = scmp.eq.s32.totalorder %s24, 0
      %p98 = por %p96, %p97
      %p99 = scmp.ne.s32.totalorder %s91, %s93
      %p100 = scmp.eq.s32.totalorder %s29, 3
      %p101 = por %p99, %p100
      %p102 = scmp.ne.s32.totalorder %s93, %s94
      %p103 = scmp.eq.s32.totalorder %s29, 0
      %p104 = por %p102, %p103
      %p105 = scmp.ne.s32.totalorder %s93, %s94
      %p106 = scmp.eq.s32.totalorder %s30, 3
      %p107 = por %p105, %p106
      %p109 = scmp.ne.s32.totalorder %s94, %s108
      %p110 = scmp.eq.s32.totalorder %s30, 0
      %p111 = por %p109, %p110
      %s113 = sadd.s32 %s112, 1
      %p116 = scmp.eq.s32.totalorder %s24, 3
      %p117 = scmp.ne.s32.totalorder %s112, %s114
      %p118 = scmp.eq.s32.totalorder %s24, 0
      %p119 = por %p117, %p118
      %p120 = scmp.ne.s32.totalorder %s112, %s114
      %p121 = scmp.eq.s32.totalorder %s29, 3
      %p122 = por %p120, %p121
      %p123 = scmp.ne.s32.totalorder %s114, %s115
      %p124 = scmp.eq.s32.totalorder %s29, 0
      %p125 = por %p123, %p124
      %p126 = scmp.ne.s32.totalorder %s114, %s115
      %p127 = scmp.eq.s32.totalorder %s30, 3
      %p128 = por %p126, %p127
      %p130 = scmp.ne.s32.totalorder %s115, %s129
      %p131 = scmp.eq.s32.totalorder %s30, 0
      %p132 = por %p130, %p131
      %s134 = sadd.s32 %s133, 1
      %p137 = scmp.eq.s32.totalorder %s24, 3
      %p138 = scmp.ne.s32.totalorder %s133, %s135
      %p139 = scmp.eq.s32.totalorder %s24, 0
      %p140 = por %p138, %p139
      %p141 = scmp.ne.s32.totalorder %s133, %s135
      %p142 = scmp.eq.s32.totalorder %s29, 3
      %p143 = por %p141, %p142
      %p144 = scmp.ne.s32.totalorder %s135, %s136
      %p145 = scmp.eq.s32.totalorder %s29, 0
      %p146 = por %p144, %p145
      %p147 = scmp.ne.s32.totalorder %s135, %s136
      %p148 = scmp.eq.s32.totalorder %s30, 3
      %p149 = por %p147, %p148
      %p151 = scmp.ne.s32.totalorder %s136, %s150
      %p152 = scmp.eq.s32.totalorder %s30, 0
      %p153 = por %p151, %p152
      %s155 = sadd.s32 %s154, 1
      %p158 = scmp.eq.s32.totalorder %s24, 3
      %p159 = scmp.ne.s32.totalorder %s154, %s156
      %p160 = scmp.eq.s32.totalorder %s24, 0
      %p161 = por %p159, %p160
      %p162 = scmp.ne.s32.totalorder %s154, %s156
      %p163 = scmp.eq.s32.totalorder %s29, 3
      %p164 = por %p162, %p163
      %p165 = scmp.ne.s32.totalorder %s156, %s157
      %p166 = scmp.eq.s32.totalorder %s29, 0
      %p167 = por %p165, %p166
      %p168 = scmp.ne.s32.totalorder %s156, %s157
      %p169 = scmp.eq.s32.totalorder %s30, 3
      %p170 = por %p168, %p169
      %p172 = scmp.ne.s32.totalorder %s157, %s171
      %p173 = scmp.eq.s32.totalorder %s30, 0
      %p174 = por %p172, %p173
      %s176 = sadd.s32 %s175, 1
      %p179 = scmp.eq.s32.totalorder %s24, 3
      %p180 = scmp.ne.s32.totalorder %s175, %s177
      %p181 = scmp.eq.s32.totalorder %s24, 0
      %p182 = por %p180, %p181
      %p183 = scmp.ne.s32.totalorder %s175, %s177
      %p184 = scmp.eq.s32.totalorder %s29, 3
      %p185 = por %p183, %p184
      %p186 = scmp.ne.s32.totalorder %s177, %s178
      %p187 = scmp.eq.s32.totalorder %s29, 0
      %p188 = por %p186, %p187
      %p189 = scmp.ne.s32.totalorder %s177, %s178
      %p190 = scmp.eq.s32.totalorder %s30, 3
      %p191 = por %p189, %p190
      %p193 = scmp.ne.s32.totalorder %s178, %s192
      %p194 = scmp.eq.s32.totalorder %s30, 0
      %p195 = por %p193, %p194
      %s197 = sadd.s32 %s196, 1
      %p200 = scmp.eq.s32.totalorder %s24, 3
      %p201 = scmp.ne.s32.totalorder %s196, %s198
      %p202 = scmp.eq.s32.totalorder %s24, 0
      %p203 = por %p201, %p202
      %p204 = scmp.ne.s32.totalorder %s196, %s198
      %p205 = scmp.eq.s32.totalorder %s29, 3
      %p206 = por %p204, %p205
      %p207 = scmp.ne.s32.totalorder %s198, %s199
      %p208 = scmp.eq.s32.totalorder %s29, 0
      %p209 = por %p207, %p208
      %p210 = scmp.ne.s32.totalorder %s198, %s199
      %p211 = scmp.eq.s32.totalorder %s30, 3
      %p212 = por %p210, %p211
      %p214 = scmp.ne.s32.totalorder %s199, %s213
      %p215 = scmp.eq.s32.totalorder %s30, 0
      %p216 = por %p214, %p215
      %s218 = sadd.s32 %s217, 1
      %p221 = scmp.eq.s32.totalorder %s24, 3
      %p222 = scmp.ne.s32.totalorder %s217, %s219
      %p223 = scmp.eq.s32.totalorder %s24, 0
      %p224 = por %p222, %p223
      %p225 = scmp.ne.s32.totalorder %s217, %s219
      %p226 = scmp.eq.s32.totalorder %s29, 3
      %p227 = por %p225, %p226
      %p228 = scmp.ne.s32.totalorder %s219, %s220
      %p229 = scmp.eq.s32.totalorder %s29, 0
      %p230 = por %p228, %p229
      %p231 = scmp.ne.s32.totalorder %s219, %s220
      %p232 = scmp.eq.s32.totalorder %s30, 3
      %p233 = por %p231, %p232
      %p235 = scmp.ne.s32.totalorder %s220, %s234
      %p236 = scmp.eq.s32.totalorder %s30, 0
      %p237 = por %p235, %p236
      %s239 = sadd.s32 %s238, 1
      %p242 = scmp.eq.s32.totalorder %s24, 3
      %p243 = scmp.ne.s32.totalorder %s238, %s240
      %p244 = scmp.eq.s32.totalorder %s24, 0
      %p245 = por %p243, %p244
      %p246 = scmp.ne.s32.totalorder %s238, %s240
      %p247 = scmp.eq.s32.totalorder %s29, 3
      %p248 = por %p246, %p247
      %p249 = scmp.ne.s32.totalorder %s240, %s241
      %p250 = scmp.eq.s32.totalorder %s29, 0
      %p251 = por %p249, %p250
      %p252 = scmp.ne.s32.totalorder %s240, %s241
      %p253 = scmp.eq.s32.totalorder %s30, 3
      %p254 = por %p252, %p253
      %p256 = scmp.ne.s32.totalorder %s241, %s255
      %p257 = scmp.eq.s32.totalorder %s30, 0
      %p258 = por %p256, %p257
      %s260 = sadd.s32 %s259, 1
      %p263 = scmp.eq.s32.totalorder %s24, 3
      %p264 = scmp.ne.s32.totalorder %s259, %s261
      %p265 = scmp.eq.s32.totalorder %s24, 0
      %p266 = por %p264, %p265
      %p267 = scmp.ne.s32.totalorder %s259, %s261
      %p268 = scmp.eq.s32.totalorder %s29, 3
      %p269 = por %p267, %p268
      %p270 = scmp.ne.s32.totalorder %s261, %s262
      %p271 = scmp.eq.s32.totalorder %s29, 0
      %p272 = por %p270, %p271
      %p273 = scmp.ne.s32.totalorder %s261, %s262
      %p274 = scmp.eq.s32.totalorder %s30, 3
      %p275 = por %p273, %p274
      %p277 = scmp.ne.s32.totalorder %s262, %s276
      %p278 = scmp.eq.s32.totalorder %s30, 0
      %p279 = por %p277, %p278
      %s281 = sadd.s32 %s280, 1
      %p284 = scmp.eq.s32.totalorder %s24, 3
      %p285 = scmp.ne.s32.totalorder %s280, %s282
      %p286 = scmp.eq.s32.totalorder %s24, 0
      %p287 = por %p285, %p286
      %p288 = scmp.ne.s32.totalorder %s280, %s282
      %p289 = scmp.eq.s32.totalorder %s29, 3
      %p290 = por %p288, %p289
      %p291 = scmp.ne.s32.totalorder %s282, %s283
      %p292 = scmp.eq.s32.totalorder %s29, 0
      %p293 = por %p291, %p292
      %p294 = scmp.ne.s32.totalorder %s282, %s283
      %p295 = scmp.eq.s32.totalorder %s30, 3
      %p296 = por %p294, %p295
      %p298 = scmp.ne.s32.totalorder %s283, %s297
      %p299 = scmp.eq.s32.totalorder %s30, 0
      %p300 = por %p298, %p299
      %s302 = sadd.s32 %s301, 1
      %p305 = scmp.eq.s32.totalorder %s24, 3
      %p306 = scmp.ne.s32.totalorder %s301, %s303
      %p307 = scmp.eq.s32.totalorder %s24, 0
      %p308 = por %p306, %p307
      %p309 = scmp.ne.s32.totalorder %s301, %s303
      %p310 = scmp.eq.s32.totalorder %s29, 3
      %p311 = por %p309, %p310
      %p312 = scmp.ne.s32.totalorder %s303, %s304
      %p313 = scmp.eq.s32.totalorder %s29, 0
      %p314 = por %p312, %p313
      %p315 = scmp.ne.s32.totalorder %s303, %s304
      %p316 = scmp.eq.s32.totalorder %s30, 3
      %p317 = por %p315, %p316
      %p319 = scmp.ne.s32.totalorder %s304, %s318
      %p320 = scmp.eq.s32.totalorder %s30, 0
      %p321 = por %p319, %p320
      %s322 = ssub.s32 %s31, %s43
      %s323 = ssub.s32 %s32, %s39
      %s324 = sor.u32 %s322, %s323
      %p325 = scmp.eq.s32.totalorder %s324, 0
      %s327 = sadd.s32 %s326, 1
      %s328 = scalar_select %p325, %s326, %s327
      %p331 = pneg %p325
      %p332 = scmp.eq.s32.totalorder %s24, 3
      %p333 = por %p331, %p332
      %p334 = scmp.ne.s32.totalorder %s326, %s329
      %p335 = scmp.eq.s32.totalorder %s24, 0
      %p336 = por %p334, %p335
      %p337 = scmp.ne.s32.totalorder %s326, %s329
      %p338 = scmp.eq.s32.totalorder %s29, 3
      %p339 = por %p337, %p338
      %p340 = scmp.ne.s32.totalorder %s329, %s330
      %p341 = scmp.eq.s32.totalorder %s29, 0
      %p342 = por %p340, %p341
      %p343 = scmp.ne.s32.totalorder %s329, %s330
      %p344 = scmp.eq.s32.totalorder %s30, 3
      %p345 = por %p343, %p344
      %p347 = scmp.ne.s32.totalorder %s330, %s346
      %p348 = scmp.eq.s32.totalorder %s30, 0
      %p349 = por %p347, %p348
      %p350 = scmp.le.s32.totalorder 1, %s24
      %p351 = scmp.lt.s32.totalorder %s24, 5
      %p352 = pnand %p350, %p351
      %p353 = pneg %p352
      // Predicated region
      $region9: #{tpu_custom_call.1} parent=5 // pred_check
        _
      $region10: #{tpu_custom_call.1} parent=5 // pred_check_branch
        %355 = sbr.rel (%p352) target = $region12
      $region11: #{tpu_custom_call.1} parent=5 // pred_region
        %s356 = ssub.s32 %s24, 1
        // Predicated region
        $region13: #{tpu_custom_call.1} parent=11 // pred_check
          %p357 = pneg %p83
        $region14: #{tpu_custom_call.1} parent=11 // pred_check_branch
          %359 = sbr.rel (%p357) target = $region16
        $region15: #{tpu_custom_call.1} parent=11 // pred_region
          %361 = vsyncadd [#allocation6], 0
          %s363 = sshll.u32 %s1, 4
          %s364 = int_to_ptr.hbm [resolvable:$true] %s363
          %s365 = sshll.u32 [#allocation5], 4
          %s366 = int_to_ptr.vmem [resolvable:$true] %s365
          %368 = dma.hbm_to_vmem [thread:$0]  %s364, 16, %s366, [#allocation6]
        $region16: #{tpu_custom_call.1} parent=11 // pred_fallthru
          _
        // Predicated region
        $region17: #{tpu_custom_call.1} parent=11 // pred_check
          %p369 = pneg %p104
        $region18: #{tpu_custom_call.1} parent=11 // pred_check_branch
          %371 = sbr.rel (%p369) target = $region20
        $region19: #{tpu_custom_call.1} parent=11 // pred_region
          _
        $region20: #{tpu_custom_call.1} parent=11 // pred_fallthru
          _
        // Predicated region
        $region21: #{tpu_custom_call.1} parent=11 // pred_check
          %p372 = pneg %p125
        $region22: #{tpu_custom_call.1} parent=11 // pred_check_branch
          %374 = sbr.rel (%p372) target = $region24
        $region23: #{tpu_custom_call.1} parent=11 // pred_region
          _
        $region24: #{tpu_custom_call.1} parent=11 // pred_fallthru
          _
        // Predicated region
        $region25: #{tpu_custom_call.1} parent=11 // pred_check
          %p375 = pneg %p146
        $region26: #{tpu_custom_call.1} parent=11 // pred_check_branch
          %377 = sbr.rel (%p375) target = $region28
        $region27: #{tpu_custom_call.1} parent=11 // pred_region
          _
        $region28: #{tpu_custom_call.1} parent=11 // pred_fallthru
          _
        // Predicated region
        $region29: #{tpu_custom_call.1} parent=11 // pred_check
          %p378 = pneg %p167
        $region30: #{tpu_custom_call.1} parent=11 // pred_check_branch
          %380 = sbr.rel (%p378) target = $region32
        $region31: #{tpu_custom_call.1} parent=11 // pred_region
          %382 = vsyncadd [#allocation9], 0
          %s383 = sshll.u32 %s5, 4
          %s384 = int_to_ptr.hbm [resolvable:$true] %s383
          %s385 = sshll.u32 [#allocation8], 4
          %s386 = int_to_ptr.vmem [resolvable:$true] %s385
          %391 = dma.hbm_to_vmem [thread:$0]  %s384, 256, %s386, [#allocation9], 64, 64, 4
        $region32: #{tpu_custom_call.1} parent=11 // pred_fallthru
          _
        // Predicated region
        $region33: #{tpu_custom_call.1} parent=11 // pred_check
          %p392 = pneg %p188
        $region34: #{tpu_custom_call.1} parent=11 // pred_check_branch
          %394 = sbr.rel (%p392) target = $region36
        $region35: #{tpu_custom_call.1} parent=11 // pred_region
          _
        $region36: #{tpu_custom_call.1} parent=11 // pred_fallthru
          _
        // Predicated region
        $region37: #{tpu_custom_call.1} parent=11 // pred_check
          %p395 = pneg %p209
        $region38: #{tpu_custom_call.1} parent=11 // pred_check_branch
          %397 = sbr.rel (%p395) target = $region40
        $region39: #{tpu_custom_call.1} parent=11 // pred_region
          _
        $region40: #{tpu_custom_call.1} parent=11 // pred_fallthru
          _
        // Predicated region
        $region41: #{tpu_custom_call.1} parent=11 // pred_check
          %p398 = pneg %p230
        $region42: #{tpu_custom_call.1} parent=11 // pred_check_branch
          %400 = sbr.rel (%p398) target = $region44
        $region43: #{tpu_custom_call.1} parent=11 // pred_region
          _
        $region44: #{tpu_custom_call.1} parent=11 // pred_fallthru
          _
        // Predicated region
        $region45: #{tpu_custom_call.1} parent=11 // pred_check
          %p401 = pneg %p251
        $region46: #{tpu_custom_call.1} parent=11 // pred_check_branch
          %403 = sbr.rel (%p401) target = $region48
        $region47: #{tpu_custom_call.1} parent=11 // pred_region
          %405 = vsyncadd [#allocation9], 0
          %s406 = sshll.u32 %s9, 4
          %s407 = int_to_ptr.hbm [resolvable:$true] %s406
          %s408 = sshll.u32 [#allocation10], 4
          %s409 = int_to_ptr.vmem [resolvable:$true] %s408
          %414 = dma.hbm_to_vmem [thread:$0]  %s407, 256, %s409, [#allocation9], 64, 64, 4
        $region48: #{tpu_custom_call.1} parent=11 // pred_fallthru
          _
        // Predicated region
        $region49: #{tpu_custom_call.1} parent=11 // pred_check
          %p415 = pneg %p272
        $region50: #{tpu_custom_call.1} parent=11 // pred_check_branch
          %417 = sbr.rel (%p415) target = $region52
        $region51: #{tpu_custom_call.1} parent=11 // pred_region
          _
        $region52: #{tpu_custom_call.1} parent=11 // pred_fallthru
          _
        // Predicated region
        $region53: #{tpu_custom_call.1} parent=11 // pred_check
          %p418 = pneg %p293
        $region54: #{tpu_custom_call.1} parent=11 // pred_check_branch
          %420 = sbr.rel (%p418) target = $region56
        $region55: #{tpu_custom_call.1} parent=11 // pred_region
          _
        $region56: #{tpu_custom_call.1} parent=11 // pred_fallthru
          _
        // Predicated region
        $region57: #{tpu_custom_call.1} parent=11 // pred_check
          %p421 = pneg %p314
        $region58: #{tpu_custom_call.1} parent=11 // pred_check_branch
          %423 = sbr.rel (%p421) target = $region60
        $region59: #{tpu_custom_call.1} parent=11 // pred_region
          _
        $region60: #{tpu_custom_call.1} parent=11 // pred_fallthru
          _
      $region12: #{tpu_custom_call.1} parent=5 // pred_fallthru
        _
      %p424 = scmp.lt.s32.totalorder %s24, 4
      // Predicated region
      $region61: #{tpu_custom_call.1} parent=5 // pred_check
        %p425 = pneg %p424
      $region62: #{tpu_custom_call.1} parent=5 // pred_check_branch
        %427 = sbr.rel (%p425) target = $region64
      $region63: #{tpu_custom_call.1} parent=5 // pred_region
        // Predicated region
        $region65: #{tpu_custom_call.1} parent=63 // pred_check
          %p428 = pneg %p56
        $region66: #{tpu_custom_call.1} parent=63 // pred_check_branch
          %430 = sbr.rel (%p428) target = $region68
        $region67: #{tpu_custom_call.1} parent=63 // pred_region
          %p431 = scmp.lt.s32.totalorder %s31, 1
          %s432 = scalar_select %p431, %s31, 1
          %s433 = smul.addr %s432, 4
          %s434 = smul.addr %s433, 8
          %s435 = scalar_lea.vmem %s0, %s434
        $region68: #{tpu_custom_call.1} parent=63 // pred_fallthru
          _
      $region64: #{tpu_custom_call.1} parent=5 // pred_fallthru
        _
      %p436 = scmp.le.s32.totalorder 1, %s24
      %p437 = scmp.lt.s32.totalorder %s24, 5
      %p438 = pnand %p436, %p437
      %p439 = pneg %p438
      // Predicated region
      $region69: #{tpu_custom_call.1} parent=5 // pred_check
        _
      $region70: #{tpu_custom_call.1} parent=5 // pred_check_branch
        %441 = sbr.rel (%p438) target = $region72
      $region71: #{tpu_custom_call.1} parent=5 // pred_region
        %s442 = ssub.s32 %s24, 1
        // Predicated region
        $region73: #{tpu_custom_call.1} parent=71 // pred_check
          %p443 = pneg %p83
        $region74: #{tpu_custom_call.1} parent=71 // pred_check_branch
          %445 = sbr.rel (%p443) target = $region76
        $region75: #{tpu_custom_call.1} parent=71 // pred_region
          %447 = dma.done [#allocation6], 16
        $region76: #{tpu_custom_call.1} parent=71 // pred_fallthru
          _
        // Predicated region
        $region77: #{tpu_custom_call.1} parent=71 // pred_check
          %p448 = pneg %p167
        $region78: #{tpu_custom_call.1} parent=71 // pred_check_branch
          %450 = sbr.rel (%p448) target = $region80
        $region79: #{tpu_custom_call.1} parent=71 // pred_region
          %452 = dma.done [#allocation9], 256
        $region80: #{tpu_custom_call.1} parent=71 // pred_fallthru
          _
        // Predicated region
        $region81: #{tpu_custom_call.1} parent=71 // pred_check
          %p453 = pneg %p251
        $region82: #{tpu_custom_call.1} parent=71 // pred_check_branch
          %455 = sbr.rel (%p453) target = $region84
        $region83: #{tpu_custom_call.1} parent=71 // pred_region
          %457 = dma.done [#allocation9], 256
        $region84: #{tpu_custom_call.1} parent=71 // pred_fallthru
          _
        %p458 = scmp.lt.s32.totalorder %s33, 1
        %s459 = scalar_select %p458, %s33, 1
        %s460 = smul.addr %s459, 4
        %s461 = smul.addr %s460, 8
        %s462 = scalar_lea.vmem %s0, %s461
        %p463 = pneg %p62
        %p464 = pneg %p59
        %p465 = pneg %p83
        %p466 = pneg %p80
        %p467 = pneg %p104
        %p468 = pneg %p101
        %p469 = pneg %p125
        %p470 = pneg %p122
        %p471 = pneg %p146
        %p472 = pneg %p143
        %p473 = pneg %p167
        %p474 = pneg %p164
        %p475 = pneg %p188
        %p476 = pneg %p185
        %p477 = pneg %p209
        %p478 = pneg %p206
        %p479 = pneg %p230
        %p480 = pneg %p227
        %p481 = pneg %p251
        %p482 = pneg %p248
        %p483 = pneg %p272
        %p484 = pneg %p269
        %p485 = pneg %p293
        %p486 = pneg %p290
        %p487 = pneg %p314
        %p488 = pneg %p311
        %p489 = pneg %p342
        %p490 = pneg %p339
        %s491 = sand.u32 %s329, 1
        %s492 = scalar_lea.sflag [#allocation7], %s491
        %s493 = sand.u32 %s329, 1
        %s494 = smul.addr %s493, 16
        %s495 = scalar_lea.vmem [#allocation11], %s494
        %p496 = scmp.lt.s32.totalorder %s33, 1
        %s497 = scalar_select %p496, %s33, 1
        %s498 = smul.addr %s497, 4
        %s499 = smul.addr %s498, 8
        %s500 = scalar_lea.vmem %s0, %s499
        %s501 = smul.u32 2, %s34
        %p503 = scmp.eq.s32.totalorder %s34, 0
        // Predicated region
        $region85: #{tpu_custom_call.1} parent=71 // pred_check
          %p504 = pneg %p503
        $region86: #{tpu_custom_call.1} parent=71 // pred_check_branch
          %506 = sbr.rel (%p504) target = $region88
        $region87: #{tpu_custom_call.1} parent=71 // pred_region
          %v507 = vld [vmem:[%s500] sm:$0xff]
          %v508 = vld [vmem:[%s500 + $0x8] sm:$0xff]
          %v509 = vld [vmem:[%s500 + $0x10] sm:$0xff]
          %v510 = vld [vmem:[%s500 + $0x18] sm:$0xff]
          %v511 = vld [vmem:[#allocation5] sm:$0x1]
          %v512 = vld [vmem:[%s2] sm:$0x1]
          %vm513 = vcmask 261120
          %v514 = vsel %vm513, %v507, 0.0
          %515 = vadd.xlane.f32.xlu0 %v514
          %v516 = vpop.xlane.xlu0 %515
          %v517 = vsel %vm513, %v508, 0.0
          %518 = vadd.xlane.f32.xlu0 %v517
          %v519 = vpop.xlane.xlu0 %518
          %v520 = vsel %vm513, %v509, 0.0
          %521 = vadd.xlane.f32.xlu0 %v520
          %v522 = vpop.xlane.xlu0 %521
          %v523 = vsel %vm513, %v510, 0.0
          %524 = vadd.xlane.f32.xlu0 %v523
          %v525 = vpop.xlane.xlu0 %524
          %v526 = vrcp.pop 32.0
          %v527 = vmul.f32 32.0, %v526
          %v528 = vsub.f32 1.0, %v527
          %v529 = vmul.f32 %v526, %v528
          %v530 = vadd.f32 %v526, %v529
          %vm531 = vweird.f32 %v526
          %v532 = vsel %vm531, %v526, %v530
          %v533 = vmul.f32 %v516, %v532
          %v534 = vmul.f32 %v519, %v532
          %v535 = vmul.f32 %v522, %v532
          %v536 = vmul.f32 %v525, %v532
          %v537 = vsub.f32 %v507, %v533
          %v538 = vsub.f32 %v508, %v534
          %v539 = vsub.f32 %v509, %v535
          %v540 = vsub.f32 %v510, %v536
          %v541 = vmul.f32 %v537, %v537
          %v542 = vmul.f32 %v538, %v538
          %v543 = vmul.f32 %v539, %v539
          %v544 = vmul.f32 %v540, %v540
          %v545 = vsel %vm513, %v541, 0.0
          %546 = vadd.xlane.f32.xlu0 %v545
          %v547 = vpop.xlane.xlu0 %546
          %v548 = vsel %vm513, %v542, 0.0
          %549 = vadd.xlane.f32.xlu0 %v548
          %v550 = vpop.xlane.xlu0 %549
          %v551 = vsel %vm513, %v543, 0.0
          %552 = vadd.xlane.f32.xlu0 %v551
          %v553 = vpop.xlane.xlu0 %552
          %v554 = vsel %vm513, %v544, 0.0
          %555 = vadd.xlane.f32.xlu0 %v554
          %v556 = vpop.xlane.xlu0 %555
          %v557 = vmul.f32 %v547, %v532
          %v558 = vmul.f32 %v550, %v532
          %v559 = vmul.f32 %v553, %v532
          %v560 = vmul.f32 %v556, %v532
          %v561 = vadd.f32 %v557, 1e-05
          %v562 = vadd.f32 %v558, 1e-05
          %v563 = vadd.f32 %v559, 1e-05
          %v564 = vadd.f32 %v560, 1e-05
          %v565 = vrsqrt.pop %v561
          %v566 = vmul.f32 %v565, %v561
          %v567 = vmul.f32 %v566, %v565
          %v568 = vmul.f32 0.5, %v567
          %v569 = vsub.f32 1.5, %v568
          %v570 = vmul.f32 %v565, %v569
          %vm571 = vweird.f32 %v561
          %vm572 = vweird.f32 %v565
          %vm573 = vmor %vm571, %vm572
          %v574 = vsel %vm573, %v565, %v570
          %v575 = vrsqrt.pop %v562
          %v576 = vmul.f32 %v575, %v562
          %v577 = vmul.f32 %v576, %v575
          %v578 = vmul.f32 0.5, %v577
          %v579 = vsub.f32 1.5, %v578
          %v580 = vmul.f32 %v575, %v579
          %vm581 = vweird.f32 %v562
          %vm582 = vweird.f32 %v575
          %vm583 = vmor %vm581, %vm582
          %v584 = vsel %vm583, %v575, %v580
          %v585 = vrsqrt.pop %v563
          %v586 = vmul.f32 %v585, %v563
          %v587 = vmul.f32 %v586, %v585
          %v588 = vmul.f32 0.5, %v587
          %v589 = vsub.f32 1.5, %v588
          %v590 = vmul.f32 %v585, %v589
          %vm591 = vweird.f32 %v563
          %vm592 = vweird.f32 %v585
          %vm593 = vmor %vm591, %vm592
          %v594 = vsel %vm593, %v585, %v590
          %v595 = vrsqrt.pop %v564
          %v596 = vmul.f32 %v595, %v564
          %v597 = vmul.f32 %v596, %v595
          %v598 = vmul.f32 0.5, %v597
          %v599 = vsub.f32 1.5, %v598
          %v600 = vmul.f32 %v595, %v599
          %vm601 = vweird.f32 %v564
          %vm602 = vweird.f32 %v595
          %vm603 = vmor %vm601, %vm602
          %v604 = vsel %vm603, %v595, %v600
          %v605 = vmul.f32 %v537, %v574
          %v606 = vmul.f32 %v538, %v584
          %v607 = vmul.f32 %v539, %v594
          %v608 = vmul.f32 %v540, %v604
          %v610 = vperm.slane %v511, 0
          %v612 = vmul.f32 %v605, %v610
          %v613 = vmul.f32 %v606, %v610
          %v614 = vmul.f32 %v607, %v610
          %v615 = vmul.f32 %v608, %v610
          %v617 = vperm.slane %v512, 0
          %v619 = vadd.f32 %v612, %v617
          %v620 = vadd.f32 %v613, %v617
          %v621 = vadd.f32 %v614, %v617
          %v622 = vadd.f32 %v615, %v617
          %v623 = vpack.c.bf16 %v620, %v619
          %v624 = vpack.c.bf16 %v622, %v621
          %v625 = vld [vmem:[%s3] sm:$0xf]
          %v626 = vld [vmem:[%s3 + $0x4] sm:$0xf]
          %v627 = vld [vmem:[%s3 + $0x8] sm:$0xf]
          %v628 = vld [vmem:[%s3 + $0xc] sm:$0xf]
          %v629 = vld [vmem:[%s4] sm:$0x1]
          %v631 = vperm.slane %v629, 0
          %v637 = vunpack.c.l.b16 %v625
          %v638 = vunpack.c.l.b16 %v626
          %v639 = vunpack.c.l.b16 %v627
          %v640 = vunpack.c.l.b16 %v628
          %v641 = vpack.c.b16 %v638, %v637
          %v642 = vpack.c.b16 %v640, %v639
          %v646 = vsel %vm513, %v623, 0
          %v649 = vsel %vm513, %v624, 0
          %651 = vmatpush.bf16.msra.mxu0 0
          %652 = vmatpush.bf16.msra.mxu0 0
          %653 = vmatpush.bf16.msra.mxu0 0
          %654 = vmatpush.bf16.msra.mxu0 0
          %655 = vmatpush.bf16.msra.mxu0 0
          %656 = vmatpush.bf16.msra.mxu0 0
          %657 = vmatpush.bf16.msra.mxu0 %v642
          %658 = vmatpush.bf16.msra.mxu0 %v641
          %659 = vmatmul.bf16.gmra.mxu0 %v646
          %v660 = vpop.f32.mrf.mxu0
          %v661 = vadd.f32 %v631, %v660
          %v662 = vpop.f32.mrf.mxu0
          %v663 = vadd.f32 %v631, %v662
          %664 = vmatmul.bf16.gmra.mxu0 %v649
          %v665 = vpop.f32.mrf.mxu0
          %v666 = vadd.f32 %v631, %v665
          %v667 = vpop.f32.mrf.mxu0
          %v668 = vadd.f32 %v631, %v667
          %669 = vdwg.mxu0
          %v670 = vmul.f32 %v661, 0.35355338
          %v671 = vmul.f32 %v663, 0.35355338
          %v672 = vmul.f32 %v666, 0.35355338
          %v673 = vmul.f32 %v668, 0.35355338
          %v674 = vpack.c.bf16 %v670, %v670
          %v675 = vpack.c.bf16 %v671, %v671
          %v676 = vpack.c.bf16 %v672, %v672
          %v677 = vpack.c.bf16 %v673, %v673
          %vm678 = vcmask 60416
          %679 = vst.msk [vmem:[#allocation2] sm:$0xf] %vm678, %v674
          %680 = vst.msk [vmem:[#allocation2 + $0x4] sm:$0xf] %vm678, %v675
          %681 = vst.msk [vmem:[#allocation2 + $0x8] sm:$0xf] %vm678, %v676
          %682 = vst.msk [vmem:[#allocation2 + $0xc] sm:$0xf] %vm678, %v677
          %v683 = vpack.c.bf16 %v661, %v661
          %v684 = vpack.c.bf16 %v663, %v663
          %v685 = vpack.c.bf16 %v666, %v666
          %v686 = vpack.c.bf16 %v668, %v668
          %691 = vrot.lane.b32.xlu0 %v683, 96
          %v692 = vpop.permute.xlu0 %691
          %693 = vrot.lane.b32.xlu0 %v684, 96
          %v694 = vpop.permute.xlu0 %693
          %695 = vrot.lane.b32.xlu0 %v685, 96
          %v696 = vpop.permute.xlu0 %695
          %697 = vrot.lane.b32.xlu0 %v686, 96
          %v698 = vpop.permute.xlu0 %697
          %703 = vst.msk [vmem:[#allocation3] sm:$0xf] %vm678, %v692
          %704 = vst.msk [vmem:[#allocation3 + $0x4] sm:$0xf] %vm678, %v694
          %705 = vst.msk [vmem:[#allocation3 + $0x8] sm:$0xf] %vm678, %v696
          %706 = vst.msk [vmem:[#allocation3 + $0xc] sm:$0xf] %vm678, %v698
          %707 = vrot.lane.b32.xlu0 %v683, 64
          %v708 = vpop.permute.xlu0 %707
          %709 = vrot.lane.b32.xlu0 %v684, 64
          %v710 = vpop.permute.xlu0 %709
          %711 = vrot.lane.b32.xlu0 %v685, 64
          %v712 = vpop.permute.xlu0 %711
          %713 = vrot.lane.b32.xlu0 %v686, 64
          %v714 = vpop.permute.xlu0 %713
          %719 = vst.msk [vmem:[#allocation4] sm:$0xf] %vm678, %v708
          %720 = vst.msk [vmem:[#allocation4 + $0x4] sm:$0xf] %vm678, %v710
          %721 = vst.msk [vmem:[#allocation4 + $0x8] sm:$0xf] %vm678, %v712
          %722 = vst.msk [vmem:[#allocation4 + $0xc] sm:$0xf] %vm678, %v714
          %727 = vrot.lane.b32.xlu0 %v674, 120
          %v728 = vpop.permute.xlu0 %727
          %729 = vrot.lane.b32.xlu0 %v675, 120
          %v730 = vpop.permute.xlu0 %729
          %731 = vrot.lane.b32.xlu0 %v676, 120
          %v732 = vpop.permute.xlu0 %731
          %733 = vrot.lane.b32.xlu0 %v677, 120
          %v734 = vpop.permute.xlu0 %733
          %s739 = scalar_lea.vmem [#allocation2], 16
          %740 = vst.msk [vmem:[%s739] sm:$0xf] %vm678, %v728
          %741 = vst.msk [vmem:[%s739 + $0x4] sm:$0xf] %vm678, %v730
          %742 = vst.msk [vmem:[%s739 + $0x8] sm:$0xf] %vm678, %v732
          %743 = vst.msk [vmem:[%s739 + $0xc] sm:$0xf] %vm678, %v734
          %744 = vrot.lane.b32.xlu0 %v683, 88
          %v745 = vpop.permute.xlu0 %744
          %746 = vrot.lane.b32.xlu0 %v684, 88
          %v747 = vpop.permute.xlu0 %746
          %748 = vrot.lane.b32.xlu0 %v685, 88
          %v749 = vpop.permute.xlu0 %748
          %750 = vrot.lane.b32.xlu0 %v686, 88
          %v751 = vpop.permute.xlu0 %750
          %s756 = scalar_lea.vmem [#allocation3], 16
          %757 = vst.msk [vmem:[%s756] sm:$0xf] %vm678, %v745
          %758 = vst.msk [vmem:[%s756 + $0x4] sm:$0xf] %vm678, %v747
          %759 = vst.msk [vmem:[%s756 + $0x8] sm:$0xf] %vm678, %v749
          %760 = vst.msk [vmem:[%s756 + $0xc] sm:$0xf] %vm678, %v751
          %761 = vrot.lane.b32.xlu0 %v683, 56
          %v762 = vpop.permute.xlu0 %761
          %763 = vrot.lane.b32.xlu0 %v684, 56
          %v764 = vpop.permute.xlu0 %763
          %765 = vrot.lane.b32.xlu0 %v685, 56
          %v766 = vpop.permute.xlu0 %765
          %767 = vrot.lane.b32.xlu0 %v686, 56
          %v768 = vpop.permute.xlu0 %767
          %s773 = scalar_lea.vmem [#allocation4], 16
          %774 = vst.msk [vmem:[%s773] sm:$0xf] %vm678, %v762
          %775 = vst.msk [vmem:[%s773 + $0x4] sm:$0xf] %vm678, %v764
          %776 = vst.msk [vmem:[%s773 + $0x8] sm:$0xf] %vm678, %v766
          %777 = vst.msk [vmem:[%s773 + $0xc] sm:$0xf] %vm678, %v768
          %778 = vrot.lane.b32.xlu0 %v674, 112
          %v779 = vpop.permute.xlu0 %778
          %780 = vrot.lane.b32.xlu0 %v675, 112
          %v781 = vpop.permute.xlu0 %780
          %782 = vrot.lane.b32.xlu0 %v676, 112
          %v783 = vpop.permute.xlu0 %782
          %784 = vrot.lane.b32.xlu0 %v677, 112
          %v785 = vpop.permute.xlu0 %784
          %s790 = scalar_lea.vmem [#allocation2], 32
          %791 = vst.msk [vmem:[%s790] sm:$0xf] %vm678, %v779
          %792 = vst.msk [vmem:[%s790 + $0x4] sm:$0xf] %vm678, %v781
          %793 = vst.msk [vmem:[%s790 + $0x8] sm:$0xf] %vm678, %v783
          %794 = vst.msk [vmem:[%s790 + $0xc] sm:$0xf] %vm678, %v785
          %795 = vrot.lane.b32.xlu0 %v683, 80
          %v796 = vpop.permute.xlu0 %795
          %797 = vrot.lane.b32.xlu0 %v684, 80
          %v798 = vpop.permute.xlu0 %797
          %799 = vrot.lane.b32.xlu0 %v685, 80
          %v800 = vpop.permute.xlu0 %799
          %801 = vrot.lane.b32.xlu0 %v686, 80
          %v802 = vpop.permute.xlu0 %801
          %s807 = scalar_lea.vmem [#allocation3], 32
          %808 = vst.msk [vmem:[%s807] sm:$0xf] %vm678, %v796
          %809 = vst.msk [vmem:[%s807 + $0x4] sm:$0xf] %vm678, %v798
          %810 = vst.msk [vmem:[%s807 + $0x8] sm:$0xf] %vm678, %v800
          %811 = vst.msk [vmem:[%s807 + $0xc] sm:$0xf] %vm678, %v802
          %812 = vrot.lane.b32.xlu0 %v683, 48
          %v813 = vpop.permute.xlu0 %812
          %814 = vrot.lane.b32.xlu0 %v684, 48
          %v815 = vpop.permute.xlu0 %814
          %816 = vrot.lane.b32.xlu0 %v685, 48
          %v817 = vpop.permute.xlu0 %816
          %818 = vrot.lane.b32.xlu0 %v686, 48
          %v819 = vpop.permute.xlu0 %818
          %s824 = scalar_lea.vmem [#allocation4], 32
          %825 = vst.msk [vmem:[%s824] sm:$0xf] %vm678, %v813
          %826 = vst.msk [vmem:[%s824 + $0x4] sm:$0xf] %vm678, %v815
          %827 = vst.msk [vmem:[%s824 + $0x8] sm:$0xf] %vm678, %v817
          %828 = vst.msk [vmem:[%s824 + $0xc] sm:$0xf] %vm678, %v819
          %829 = vrot.lane.b32.xlu0 %v674, 104
          %v830 = vpop.permute.xlu0 %829
          %831 = vrot.lane.b32.xlu0 %v675, 104
          %v832 = vpop.permute.xlu0 %831
          %833 = vrot.lane.b32.xlu0 %v676, 104
          %v834 = vpop.permute.xlu0 %833
          %835 = vrot.lane.b32.xlu0 %v677, 104
          %v836 = vpop.permute.xlu0 %835
          %s841 = scalar_lea.vmem [#allocation2], 48
          %842 = vst.msk [vmem:[%s841] sm:$0xf] %vm678, %v830
          %843 = vst.msk [vmem:[%s841 + $0x4] sm:$0xf] %vm678, %v832
          %844 = vst.msk [vmem:[%s841 + $0x8] sm:$0xf] %vm678, %v834
          %845 = vst.msk [vmem:[%s841 + $0xc] sm:$0xf] %vm678, %v836
          %846 = vrot.lane.b32.xlu0 %v683, 72
          %v847 = vpop.permute.xlu0 %846
          %848 = vrot.lane.b32.xlu0 %v684, 72
          %v849 = vpop.permute.xlu0 %848
          %850 = vrot.lane.b32.xlu0 %v685, 72
          %v851 = vpop.permute.xlu0 %850
          %852 = vrot.lane.b32.xlu0 %v686, 72
          %v853 = vpop.permute.xlu0 %852
          %s858 = scalar_lea.vmem [#allocation3], 48
          %859 = vst.msk [vmem:[%s858] sm:$0xf] %vm678, %v847
          %860 = vst.msk [vmem:[%s858 + $0x4] sm:$0xf] %vm678, %v849
          %861 = vst.msk [vmem:[%s858 + $0x8] sm:$0xf] %vm678, %v851
          %862 = vst.msk [vmem:[%s858 + $0xc] sm:$0xf] %vm678, %v853
          %863 = vrot.lane.b32.xlu0 %v683, 40
          %v864 = vpop.permute.xlu0 %863
          %865 = vrot.lane.b32.xlu0 %v684, 40
          %v866 = vpop.permute.xlu0 %865
          %867 = vrot.lane.b32.xlu0 %v685, 40
          %v868 = vpop.permute.xlu0 %867
          %869 = vrot.lane.b32.xlu0 %v686, 40
          %v870 = vpop.permute.xlu0 %869
          %s875 = scalar_lea.vmem [#allocation4], 48
          %876 = vst.msk [vmem:[%s875] sm:$0xf] %vm678, %v864
          %877 = vst.msk [vmem:[%s875 + $0x4] sm:$0xf] %vm678, %v866
          %878 = vst.msk [vmem:[%s875 + $0x8] sm:$0xf] %vm678, %v868
          %879 = vst.msk [vmem:[%s875 + $0xc] sm:$0xf] %vm678, %v870
        $region88: #{tpu_custom_call.1} parent=71 // pred_fallthru
          _
        %s880 = smul.u32 %s34, 16
        %s881 = sshra.s32 %s880, 3
        %s882 = sand.u32 %s880, 7
        %s883 = smul.addr %s881, 4
        %s884 = scalar_lea.vmem [#allocation2], %s883
        %v885 = vld [vmem:[%s884] sm:$0xf]
        %v886 = vld [vmem:[%s884 + $0x4] sm:$0xf]
        %v887 = vld [vmem:[%s884 + $0x10] sm:$0xf]
        %v888 = vld [vmem:[%s884 + $0x14] sm:$0xf]
        %v889 = vld [vmem:[%s884 + $0x20] sm:$0xf]
        %v890 = vld [vmem:[%s884 + $0x24] sm:$0xf]
        %v891 = vld [vmem:[%s884 + $0x30] sm:$0xf]
        %v892 = vld [vmem:[%s884 + $0x34] sm:$0xf]
        %v893 = vlaneseq
        %v894 = vshrl.u32 %v893, 7
        %v895 = vadd.s32 %v894, 8
        %v896 = vstv %s880
        %v897 = vadd.s32 %v896, %v894
        %v898 = vadd.s32 %v896, %v895
        %s899 = sadd.s32 %s34, 1
        // While loop
        $region89: #{tpu_custom_call.1} parent=71 // loop_pre_header
          _
        $region90: #{tpu_custom_call.1} parent=71 // loop_header
          %s901 = sphi 0, %s903
          %p902 = scmp.ge.s32.totalorder %s901, %s899
          %v906 = vphi -inf, %v1117
          %v907 = vphi -inf, %v1118
          %v908 = vphi -inf, %v1119
          %v909 = vphi -inf, %v1120
          %v910 = vphi -inf, %v1121
          %v911 = vphi -inf, %v1122
          %v912 = vphi -inf, %v1123
          %v913 = vphi -inf, %v1124
          %v914 = vphi 0.0, %v1205
          %v915 = vphi 0.0, %v1206
          %v916 = vphi 0.0, %v1207
          %v917 = vphi 0.0, %v1208
          %v918 = vphi 0.0, %v1209
          %v919 = vphi 0.0, %v1210
          %v920 = vphi 0.0, %v1211
          %v921 = vphi 0.0, %v1212
          %v922 = vphi 0.0, %v1341
          %v923 = vphi 0.0, %v1342
          %v924 = vphi 0.0, %v1343
          %v925 = vphi 0.0, %v1344
          %v926 = vphi 0.0, %v1345
          %v927 = vphi 0.0, %v1346
          %v928 = vphi 0.0, %v1347
          %v929 = vphi 0.0, %v1348
        $region91: #{tpu_custom_call.1} parent=71 // loop_header_branch
          %905 = sbr.rel (%p902) target = $region95
        $region92: #{tpu_custom_call.1} parent=71 // loop_body
          %s930 = smul.u32 %s901, 16
          %s931 = sshra.s32 %s930, 3
          %s932 = sand.u32 %s930, 7
          %s933 = smul.addr %s931, 4
          %s934 = scalar_lea.vmem [#allocation3], %s933
          %v935 = vld [vmem:[%s934] sm:$0xf]
          %v936 = vld [vmem:[%s934 + $0x4] sm:$0xf]
          %v937 = vld [vmem:[%s934 + $0x10] sm:$0xf]
          %v938 = vld [vmem:[%s934 + $0x14] sm:$0xf]
          %v939 = vld [vmem:[%s934 + $0x20] sm:$0xf]
          %v940 = vld [vmem:[%s934 + $0x24] sm:$0xf]
          %v941 = vld [vmem:[%s934 + $0x30] sm:$0xf]
          %v942 = vld [vmem:[%s934 + $0x34] sm:$0xf]
          %s943 = smul.addr %s931, 4
          %s944 = scalar_lea.vmem [#allocation4], %s943
          %v945 = vld [vmem:[%s944] sm:$0xf]
          %v946 = vld [vmem:[%s944 + $0x4] sm:$0xf]
          %v947 = vld [vmem:[%s944 + $0x10] sm:$0xf]
          %v948 = vld [vmem:[%s944 + $0x14] sm:$0xf]
          %v949 = vld [vmem:[%s944 + $0x20] sm:$0xf]
          %v950 = vld [vmem:[%s944 + $0x24] sm:$0xf]
          %v951 = vld [vmem:[%s944 + $0x30] sm:$0xf]
          %v952 = vld [vmem:[%s944 + $0x34] sm:$0xf]
          %v955 = vunpack.c.l.b16 %v885
          %v956 = vunpack.c.l.b16 %v886
          %v957 = vpack.c.b16 %v956, %v955
          %v960 = vunpack.c.l.b16 %v935
          %v961 = vunpack.c.l.b16 %v936
          %v962 = vpack.c.b16 %v961, %v960
          %vm963 = vcmask 64512
          %v965 = vsel %vm963, %v957, 0
          %v968 = vsel %vm963, %v962, 0
          %970 = vmatpush.bf16.xpose.msra.mxu0 0
          %971 = vmatpush.bf16.xpose.msra.mxu0 0
          %972 = vmatpush.bf16.xpose.msra.mxu0 0
          %973 = vmatpush.bf16.xpose.msra.mxu0 0
          %974 = vmatpush.bf16.xpose.msra.mxu0 0
          %975 = vmatpush.bf16.xpose.msra.mxu0 0
          %976 = vmatpush.bf16.xpose.msra.mxu0 0
          %977 = vmatpush.bf16.xpose.msra.mxu0 %v968
          %978 = vmatmul.bf16.gmra.mxu0 %v965
          %v979 = vpop.f32.mrf.mxu0
          %v980 = vadd.f32 0.0, %v979
          %v981 = vpop.f32.mrf.mxu0
          %v982 = vadd.f32 0.0, %v981
          %983 = vdwg.mxu0
          %v986 = vunpack.c.l.b16 %v887
          %v987 = vunpack.c.l.b16 %v888
          %v988 = vpack.c.b16 %v987, %v986
          %v991 = vunpack.c.l.b16 %v937
          %v992 = vunpack.c.l.b16 %v938
          %v993 = vpack.c.b16 %v992, %v991
          %v995 = vsel %vm963, %v988, 0
          %v998 = vsel %vm963, %v993, 0
          %1000 = vmatpush.bf16.xpose.msra.mxu0 0
          %1001 = vmatpush.bf16.xpose.msra.mxu0 0
          %1002 = vmatpush.bf16.xpose.msra.mxu0 0
          %1003 = vmatpush.bf16.xpose.msra.mxu0 0
          %1004 = vmatpush.bf16.xpose.msra.mxu0 0
          %1005 = vmatpush.bf16.xpose.msra.mxu0 0
          %1006 = vmatpush.bf16.xpose.msra.mxu0 0
          %1007 = vmatpush.bf16.xpose.msra.mxu0 %v998
          %1008 = vmatmul.bf16.gmra.mxu0 %v995
          %v1009 = vpop.f32.mrf.mxu0
          %v1010 = vadd.f32 0.0, %v1009
          %v1011 = vpop.f32.mrf.mxu0
          %v1012 = vadd.f32 0.0, %v1011
          %1013 = vdwg.mxu0
          %v1016 = vunpack.c.l.b16 %v889
          %v1017 = vunpack.c.l.b16 %v890
          %v1018 = vpack.c.b16 %v1017, %v1016
          %v1021 = vunpack.c.l.b16 %v939
          %v1022 = vunpack.c.l.b16 %v940
          %v1023 = vpack.c.b16 %v1022, %v1021
          %v1025 = vsel %vm963, %v1018, 0
          %v1028 = vsel %vm963, %v1023, 0
          %1030 = vmatpush.bf16.xpose.msra.mxu0 0
          %1031 = vmatpush.bf16.xpose.msra.mxu0 0
          %1032 = vmatpush.bf16.xpose.msra.mxu0 0
          %1033 = vmatpush.bf16.xpose.msra.mxu0 0
          %1034 = vmatpush.bf16.xpose.msra.mxu0 0
          %1035 = vmatpush.bf16.xpose.msra.mxu0 0
          %1036 = vmatpush.bf16.xpose.msra.mxu0 0
          %1037 = vmatpush.bf16.xpose.msra.mxu0 %v1028
          %1038 = vmatmul.bf16.gmra.mxu0 %v1025
          %v1039 = vpop.f32.mrf.mxu0
          %v1040 = vadd.f32 0.0, %v1039
          %v1041 = vpop.f32.mrf.mxu0
          %v1042 = vadd.f32 0.0, %v1041
          %1043 = vdwg.mxu0
          %v1046 = vunpack.c.l.b16 %v891
          %v1047 = vunpack.c.l.b16 %v892
          %v1048 = vpack.c.b16 %v1047, %v1046
          %v1051 = vunpack.c.l.b16 %v941
          %v1052 = vunpack.c.l.b16 %v942
          %v1053 = vpack.c.b16 %v1052, %v1051
          %v1055 = vsel %vm963, %v1048, 0
          %v1058 = vsel %vm963, %v1053, 0
          %1060 = vmatpush.bf16.xpose.msra.mxu0 0
          %1061 = vmatpush.bf16.xpose.msra.mxu0 0
          %1062 = vmatpush.bf16.xpose.msra.mxu0 0
          %1063 = vmatpush.bf16.xpose.msra.mxu0 0
          %1064 = vmatpush.bf16.xpose.msra.mxu0 0
          %1065 = vmatpush.bf16.xpose.msra.mxu0 0
          %1066 = vmatpush.bf16.xpose.msra.mxu0 0
          %1067 = vmatpush.bf16.xpose.msra.mxu0 %v1058
          %1068 = vmatmul.bf16.gmra.mxu0 %v1055
          %v1069 = vpop.f32.mrf.mxu0
          %v1070 = vadd.f32 0.0, %v1069
          %v1071 = vpop.f32.mrf.mxu0
          %v1072 = vadd.f32 0.0, %v1071
          %1073 = vdwg.mxu0
          %v1074 = vlaneseq
          %v1075 = vand.u32 %v1074, 127
          %v1076 = vstv %s930
          %v1077 = vadd.s32 %v1076, %v1075
          %vm1078 = vcmp.le.s32.totalorder %v1077, %v897
          %vm1079 = vcmp.le.s32.totalorder %v1077, %v898
          %v1080 = vsel %vm1078, 1, 0
          %v1081 = vsel %vm1079, 1, 0
          %vm1082 = vcmp.eq.s32.totalorder %v1080, 1
          %vm1083 = vcmp.eq.s32.totalorder %v1081, 1
          %v1084 = vsel %vm1082, %v980, -1e+30
          %v1085 = vsel %vm1083, %v982, -1e+30
          %v1086 = vsel %vm1082, %v1010, -1e+30
          %v1087 = vsel %vm1083, %v1012, -1e+30
          %v1088 = vsel %vm1082, %v1040, -1e+30
          %v1089 = vsel %vm1083, %v1042, -1e+30
          %v1090 = vsel %vm1082, %v1070, -1e+30
          %v1091 = vsel %vm1083, %v1072, -1e+30
          %vm1092 = vcmask 130048
          %v1093 = vsel %vm1092, %v1084, -inf
          %1094 = vmax.xlane.f32.xlu0 %v1093
          %v1095 = vpop.xlane.xlu0 %1094
          %v1096 = vsel %vm1092, %v1085, -inf
          %1097 = vmax.xlane.f32.xlu0 %v1096
          %v1098 = vpop.xlane.xlu0 %1097
          %v1099 = vsel %vm1092, %v1086, -inf
          %1100 = vmax.xlane.f32.xlu0 %v1099
          %v1101 = vpop.xlane.xlu0 %1100
          %v1102 = vsel %vm1092, %v1087, -inf
          %1103 = vmax.xlane.f32.xlu0 %v1102
          %v1104 = vpop.xlane.xlu0 %1103
          %v1105 = vsel %vm1092, %v1088, -inf
          %1106 = vmax.xlane.f32.xlu0 %v1105
          %v1107 = vpop.xlane.xlu0 %1106
          %v1108 = vsel %vm1092, %v1089, -inf
          %1109 = vmax.xlane.f32.xlu0 %v1108
          %v1110 = vpop.xlane.xlu0 %1109
          %v1111 = vsel %vm1092, %v1090, -inf
          %1112 = vmax.xlane.f32.xlu0 %v1111
          %v1113 = vpop.xlane.xlu0 %1112
          %v1114 = vsel %vm1092, %v1091, -inf
          %1115 = vmax.xlane.f32.xlu0 %v1114
          %v1116 = vpop.xlane.xlu0 %1115
          %v1117 = vmax.f32 %v906, %v1095
          %v1118 = vmax.f32 %v907, %v1098
          %v1119 = vmax.f32 %v908, %v1101
          %v1120 = vmax.f32 %v909, %v1104
          %v1121 = vmax.f32 %v910, %v1107
          %v1122 = vmax.f32 %v911, %v1110
          %v1123 = vmax.f32 %v912, %v1113
          %v1124 = vmax.f32 %v913, %v1116
          %v1125 = vsub.f32 %v906, %v1117
          %v1126 = vsub.f32 %v907, %v1118
          %v1127 = vsub.f32 %v908, %v1119
          %v1128 = vsub.f32 %v909, %v1120
          %v1129 = vsub.f32 %v910, %v1121
          %v1130 = vsub.f32 %v911, %v1122
          %v1131 = vsub.f32 %v912, %v1123
          %v1132 = vsub.f32 %v913, %v1124
          %v1133 = vmul.f32 %v1125, 1.442695
          %v1134 = vpow.pop %v1133
          %v1135 = vmul.f32 %v1126, 1.442695
          %v1136 = vpow.pop %v1135
          %v1137 = vmul.f32 %v1127, 1.442695
          %v1138 = vpow.pop %v1137
          %v1139 = vmul.f32 %v1128, 1.442695
          %v1140 = vpow.pop %v1139
          %v1141 = vmul.f32 %v1129, 1.442695
          %v1142 = vpow.pop %v1141
          %v1143 = vmul.f32 %v1130, 1.442695
          %v1144 = vpow.pop %v1143
          %v1145 = vmul.f32 %v1131, 1.442695
          %v1146 = vpow.pop %v1145
          %v1147 = vmul.f32 %v1132, 1.442695
          %v1148 = vpow.pop %v1147
          %v1149 = vsub.f32 %v1084, %v1117
          %v1150 = vsub.f32 %v1085, %v1118
          %v1151 = vsub.f32 %v1086, %v1119
          %v1152 = vsub.f32 %v1087, %v1120
          %v1153 = vsub.f32 %v1088, %v1121
          %v1154 = vsub.f32 %v1089, %v1122
          %v1155 = vsub.f32 %v1090, %v1123
          %v1156 = vsub.f32 %v1091, %v1124
          %v1157 = vmul.f32 %v1149, 1.442695
          %v1158 = vpow.pop %v1157
          %v1159 = vmul.f32 %v1150, 1.442695
          %v1160 = vpow.pop %v1159
          %v1161 = vmul.f32 %v1151, 1.442695
          %v1162 = vpow.pop %v1161
          %v1163 = vmul.f32 %v1152, 1.442695
          %v1164 = vpow.pop %v1163
          %v1165 = vmul.f32 %v1153, 1.442695
          %v1166 = vpow.pop %v1165
          %v1167 = vmul.f32 %v1154, 1.442695
          %v1168 = vpow.pop %v1167
          %v1169 = vmul.f32 %v1155, 1.442695
          %v1170 = vpow.pop %v1169
          %v1171 = vmul.f32 %v1156, 1.442695
          %v1172 = vpow.pop %v1171
          %v1173 = vmul.f32 %v1134, %v914
          %v1174 = vmul.f32 %v1136, %v915
          %v1175 = vmul.f32 %v1138, %v916
          %v1176 = vmul.f32 %v1140, %v917
          %v1177 = vmul.f32 %v1142, %v918
          %v1178 = vmul.f32 %v1144, %v919
          %v1179 = vmul.f32 %v1146, %v920
          %v1180 = vmul.f32 %v1148, %v921
          %v1181 = vsel %vm1092, %v1158, 0.0
          %1182 = vadd.xlane.f32.xlu0 %v1181
          %v1183 = vpop.xlane.xlu0 %1182
          %v1184 = vsel %vm1092, %v1160, 0.0
          %1185 = vadd.xlane.f32.xlu0 %v1184
          %v1186 = vpop.xlane.xlu0 %1185
          %v1187 = vsel %vm1092, %v1162, 0.0
          %1188 = vadd.xlane.f32.xlu0 %v1187
          %v1189 = vpop.xlane.xlu0 %1188
          %v1190 = vsel %vm1092, %v1164, 0.0
          %1191 = vadd.xlane.f32.xlu0 %v1190
          %v1192 = vpop.xlane.xlu0 %1191
          %v1193 = vsel %vm1092, %v1166, 0.0
          %1194 = vadd.xlane.f32.xlu0 %v1193
          %v1195 = vpop.xlane.xlu0 %1194
          %v1196 = vsel %vm1092, %v1168, 0.0
          %1197 = vadd.xlane.f32.xlu0 %v1196
          %v1198 = vpop.xlane.xlu0 %1197
          %v1199 = vsel %vm1092, %v1170, 0.0
          %1200 = vadd.xlane.f32.xlu0 %v1199
          %v1201 = vpop.xlane.xlu0 %1200
          %v1202 = vsel %vm1092, %v1172, 0.0
          %1203 = vadd.xlane.f32.xlu0 %v1202
          %v1204 = vpop.xlane.xlu0 %1203
          %v1205 = vadd.f32 %v1173, %v1183
          %v1206 = vadd.f32 %v1174, %v1186
          %v1207 = vadd.f32 %v1175, %v1189
          %v1208 = vadd.f32 %v1176, %v1192
          %v1209 = vadd.f32 %v1177, %v1195
          %v1210 = vadd.f32 %v1178, %v1198
          %v1211 = vadd.f32 %v1179, %v1201
          %v1212 = vadd.f32 %v1180, %v1204
          %v1213 = vmul.f32 %v1134, %v922
          %v1214 = vmul.f32 %v1136, %v923
          %v1215 = vmul.f32 %v1138, %v924
          %v1216 = vmul.f32 %v1140, %v925
          %v1217 = vmul.f32 %v1142, %v926
          %v1218 = vmul.f32 %v1144, %v927
          %v1219 = vmul.f32 %v1146, %v928
          %v1220 = vmul.f32 %v1148, %v929
          %v1221 = vpack.c.bf16 %v1158, %v1158
          %v1222 = vpack.c.bf16 %v1160, %v1160
          %v1223 = vpack.c.bf16 %v1162, %v1162
          %v1224 = vpack.c.bf16 %v1164, %v1164
          %v1225 = vpack.c.bf16 %v1166, %v1166
          %v1226 = vpack.c.bf16 %v1168, %v1168
          %v1227 = vpack.c.bf16 %v1170, %v1170
          %v1228 = vpack.c.bf16 %v1172, %v1172
          %v1231 = vunpack.c.l.b16 %v1221
          %v1232 = vunpack.c.l.b16 %v1222
          %v1233 = vpack.c.b16 %v1232, %v1231
          %v1236 = vunpack.c.l.b16 %v945
          %v1237 = vunpack.c.l.b16 %v946
          %v1238 = vpack.c.b16 %v1237, %v1236
          %v1241 = vsel %vm1092, %v1233, 0
          %1243 = vmatpush.bf16.msra.mxu0 0
          %1244 = vmatpush.bf16.msra.mxu0 0
          %1245 = vmatpush.bf16.msra.mxu0 0
          %1246 = vmatpush.bf16.msra.mxu0 0
          %1247 = vmatpush.bf16.msra.mxu0 0
          %1248 = vmatpush.bf16.msra.mxu0 0
          %1249 = vmatpush.bf16.msra.mxu0 0
          %1250 = vmatpush.bf16.msra.mxu0 %v1238
          %1251 = vmatmul.bf16.gmra.mxu0 %v1241
          %v1252 = vpop.f32.mrf.mxu0
          %v1253 = vadd.f32 0.0, %v1252
          %v1254 = vpop.f32.mrf.mxu0
          %v1255 = vadd.f32 0.0, %v1254
          %1256 = vdwg.mxu0
          %v1259 = vunpack.c.l.b16 %v1223
          %v1260 = vunpack.c.l.b16 %v1224
          %v1261 = vpack.c.b16 %v1260, %v1259
          %v1264 = vunpack.c.l.b16 %v947
          %v1265 = vunpack.c.l.b16 %v948
          %v1266 = vpack.c.b16 %v1265, %v1264
          %v1269 = vsel %vm1092, %v1261, 0
          %1271 = vmatpush.bf16.msra.mxu0 0
          %1272 = vmatpush.bf16.msra.mxu0 0
          %1273 = vmatpush.bf16.msra.mxu0 0
          %1274 = vmatpush.bf16.msra.mxu0 0
          %1275 = vmatpush.bf16.msra.mxu0 0
          %1276 = vmatpush.bf16.msra.mxu0 0
          %1277 = vmatpush.bf16.msra.mxu0 0
          %1278 = vmatpush.bf16.msra.mxu0 %v1266
          %1279 = vmatmul.bf16.gmra.mxu0 %v1269
          %v1280 = vpop.f32.mrf.mxu0
          %v1281 = vadd.f32 0.0, %v1280
          %v1282 = vpop.f32.mrf.mxu0
          %v1283 = vadd.f32 0.0, %v1282
          %1284 = vdwg.mxu0
          %v1287 = vunpack.c.l.b16 %v1225
          %v1288 = vunpack.c.l.b16 %v1226
          %v1289 = vpack.c.b16 %v1288, %v1287
          %v1292 = vunpack.c.l.b16 %v949
          %v1293 = vunpack.c.l.b16 %v950
          %v1294 = vpack.c.b16 %v1293, %v1292
          %v1297 = vsel %vm1092, %v1289, 0
          %1299 = vmatpush.bf16.msra.mxu0 0
          %1300 = vmatpush.bf16.msra.mxu0 0
          %1301 = vmatpush.bf16.msra.mxu0 0
          %1302 = vmatpush.bf16.msra.mxu0 0
          %1303 = vmatpush.bf16.msra.mxu0 0
          %1304 = vmatpush.bf16.msra.mxu0 0
          %1305 = vmatpush.bf16.msra.mxu0 0
          %1306 = vmatpush.bf16.msra.mxu0 %v1294
          %1307 = vmatmul.bf16.gmra.mxu0 %v1297
          %v1308 = vpop.f32.mrf.mxu0
          %v1309 = vadd.f32 0.0, %v1308
          %v1310 = vpop.f32.mrf.mxu0
          %v1311 = vadd.f32 0.0, %v1310
          %1312 = vdwg.mxu0
          %v1315 = vunpack.c.l.b16 %v1227
          %v1316 = vunpack.c.l.b16 %v1228
          %v1317 = vpack.c.b16 %v1316, %v1315
          %v1320 = vunpack.c.l.b16 %v951
          %v1321 = vunpack.c.l.b16 %v952
          %v1322 = vpack.c.b16 %v1321, %v1320
          %v1325 = vsel %vm1092, %v1317, 0
          %1327 = vmatpush.bf16.msra.mxu0 0
          %1328 = vmatpush.bf16.msra.mxu0 0
          %1329 = vmatpush.bf16.msra.mxu0 0
          %1330 = vmatpush.bf16.msra.mxu0 0
          %1331 = vmatpush.bf16.msra.mxu0 0
          %1332 = vmatpush.bf16.msra.mxu0 0
          %1333 = vmatpush.bf16.msra.mxu0 0
          %1334 = vmatpush.bf16.msra.mxu0 %v1322
          %1335 = vmatmul.bf16.gmra.mxu0 %v1325
          %v1336 = vpop.f32.mrf.mxu0
          %v1337 = vadd.f32 0.0, %v1336
          %v1338 = vpop.f32.mrf.mxu0
          %v1339 = vadd.f32 0.0, %v1338
          %1340 = vdwg.mxu0
          %v1341 = vadd.f32 %v1213, %v1253
          %v1342 = vadd.f32 %v1214, %v1255
          %v1343 = vadd.f32 %v1215, %v1281
          %v1344 = vadd.f32 %v1216, %v1283
          %v1345 = vadd.f32 %v1217, %v1309
          %v1346 = vadd.f32 %v1218, %v1311
          %v1347 = vadd.f32 %v1219, %v1337
          %v1348 = vadd.f32 %v1220, %v1339
        $region93: #{tpu_custom_call.1} parent=71 // loop_footer
          %s903 = sadd.s32 %s901, 1
        $region94: #{tpu_custom_call.1} parent=71 // loop_footer_branch
          %900 = sbr.rel target = $region90
        $region95: #{tpu_custom_call.1} parent=71 // loop_exit
          _
        %v1349 = vrcp.pop %v914
        %v1350 = vrcp.pop %v915
        %v1351 = vrcp.pop %v916
        %v1352 = vrcp.pop %v917
        %v1353 = vrcp.pop %v918
        %v1354 = vrcp.pop %v919
        %v1355 = vrcp.pop %v920
        %v1356 = vrcp.pop %v921
        %v1357 = vmul.f32 %v922, %v1349
        %v1358 = vmul.f32 %v923, %v1350
        %v1359 = vmul.f32 %v924, %v1351
        %v1360 = vmul.f32 %v925, %v1352
        %v1361 = vmul.f32 %v926, %v1353
        %v1362 = vmul.f32 %v927, %v1354
        %v1363 = vmul.f32 %v928, %v1355
        %v1364 = vmul.f32 %v929, %v1356
        %1367 = vrot.lane.b32.xlu0 %v1359, 8
        %v1368 = vpop.permute.xlu0 %1367
        %1369 = vrot.lane.b32.xlu0 %v1360, 8
        %v1370 = vpop.permute.xlu0 %1369
        %1375 = vrot.lane.b32.xlu0 %v1361, 16
        %v1376 = vpop.permute.xlu0 %1375
        %1377 = vrot.lane.b32.xlu0 %v1362, 16
        %v1378 = vpop.permute.xlu0 %1377
        %1383 = vrot.lane.b32.xlu0 %v1363, 24
        %v1384 = vpop.permute.xlu0 %1383
        %1385 = vrot.lane.b32.xlu0 %v1364, 24
        %v1386 = vpop.permute.xlu0 %1385
        %vm1389 = vcmask 64512
        %v1390 = vsel %vm1389, %v1357, %v1368
        %v1391 = vsel %vm1389, %v1358, %v1370
        %vm1392 = vcmask 130048
        %v1393 = vsel %vm1392, %v1390, %v1376
        %v1394 = vsel %vm1392, %v1391, %v1378
        %vm1395 = vcmask 195584
        %v1396 = vsel %vm1395, %v1393, %v1384
        %v1397 = vsel %vm1395, %v1394, %v1386
        %v1398 = vpack.c.bf16 %v1397, %v1396
        %v1399 = vld [vmem:[#allocation8] sm:$0xf]
        %v1400 = vld [vmem:[#allocation8 + $0x4] sm:$0xf]
        %v1401 = vld [vmem:[#allocation8 + $0x8] sm:$0xf]
        %v1402 = vld [vmem:[#allocation8 + $0xc] sm:$0xf]
        %v1403 = vld [vmem:[%s6] sm:$0x1]
        %v1405 = vperm.slane %v1403, 0
        %v1411 = vunpack.c.l.b16 %v1399
        %v1412 = vunpack.c.l.b16 %v1400
        %v1413 = vunpack.c.l.b16 %v1401
        %v1414 = vunpack.c.l.b16 %v1402
        %v1415 = vpack.c.b16 %v1412, %v1411
        %v1416 = vpack.c.b16 %v1414, %v1413
        %vm1419 = vcmask 261120
        %v1421 = vsel %vm1419, %v1398, 0
        %1423 = vmatpush.bf16.msra.mxu0 0
        %1424 = vmatpush.bf16.msra.mxu0 0
        %1425 = vmatpush.bf16.msra.mxu0 0
        %1426 = vmatpush.bf16.msra.mxu0 0
        %1427 = vmatpush.bf16.msra.mxu0 0
        %1428 = vmatpush.bf16.msra.mxu0 0
        %1429 = vmatpush.bf16.msra.mxu0 %v1416
        %1430 = vmatpush.bf16.msra.mxu0 %v1415
        %1431 = vmatmul.bf16.gmra.mxu0 %v1421
        %v1432 = vpop.f32.mrf.mxu0
        %v1433 = vadd.f32 %v1405, %v1432
        %v1434 = vpop.f32.mrf.mxu0
        %v1435 = vadd.f32 %v1405, %v1434
        %1436 = vdwg.mxu0
        %s1437 = scalar_lea.vmem %s500, %s880
        %v1438 = vld [vmem:[%s1437] sm:$0xff]
        %v1439 = vld [vmem:[%s1437 + $0x8] sm:$0xff]
        %v1440 = vadd.f32 %v1438, %v1433
        %v1441 = vadd.f32 %v1439, %v1435
        %v1442 = vld [vmem:[%s7] sm:$0x1]
        %v1443 = vld [vmem:[%s8] sm:$0x1]
        %v1444 = vsel %vm1419, %v1440, 0.0
        %1445 = vadd.xlane.f32.xlu0 %v1444
        %v1446 = vpop.xlane.xlu0 %1445
        %v1447 = vsel %vm1419, %v1441, 0.0
        %1448 = vadd.xlane.f32.xlu0 %v1447
        %v1449 = vpop.xlane.xlu0 %1448
        %v1450 = vrcp.pop 32.0
        %v1451 = vmul.f32 32.0, %v1450
        %v1452 = vsub.f32 1.0, %v1451
        %v1453 = vmul.f32 %v1450, %v1452
        %v1454 = vadd.f32 %v1450, %v1453
        %vm1455 = vweird.f32 %v1450
        %v1456 = vsel %vm1455, %v1450, %v1454
        %v1457 = vmul.f32 %v1446, %v1456
        %v1458 = vmul.f32 %v1449, %v1456
        %v1459 = vsub.f32 %v1440, %v1457
        %v1460 = vsub.f32 %v1441, %v1458
        %v1461 = vmul.f32 %v1459, %v1459
        %v1462 = vmul.f32 %v1460, %v1460
        %v1463 = vsel %vm1419, %v1461, 0.0
        %1464 = vadd.xlane.f32.xlu0 %v1463
        %v1465 = vpop.xlane.xlu0 %1464
        %v1466 = vsel %vm1419, %v1462, 0.0
        %1467 = vadd.xlane.f32.xlu0 %v1466
        %v1468 = vpop.xlane.xlu0 %1467
        %v1469 = vmul.f32 %v1465, %v1456
        %v1470 = vmul.f32 %v1468, %v1456
        %v1471 = vadd.f32 %v1469, 1e-05
        %v1472 = vadd.f32 %v1470, 1e-05
        %v1473 = vrsqrt.pop %v1471
        %v1474 = vmul.f32 %v1473, %v1471
        %v1475 = vmul.f32 %v1474, %v1473
        %v1476 = vmul.f32 0.5, %v1475
        %v1477 = vsub.f32 1.5, %v1476
        %v1478 = vmul.f32 %v1473, %v1477
        %vm1479 = vweird.f32 %v1471
        %vm1480 = vweird.f32 %v1473
        %vm1481 = vmor %vm1479, %vm1480
        %v1482 = vsel %vm1481, %v1473, %v1478
        %v1483 = vrsqrt.pop %v1472
        %v1484 = vmul.f32 %v1483, %v1472
        %v1485 = vmul.f32 %v1484, %v1483
        %v1486 = vmul.f32 0.5, %v1485
        %v1487 = vsub.f32 1.5, %v1486
        %v1488 = vmul.f32 %v1483, %v1487
        %vm1489 = vweird.f32 %v1472
        %vm1490 = vweird.f32 %v1483
        %vm1491 = vmor %vm1489, %vm1490
        %v1492 = vsel %vm1491, %v1483, %v1488
        %v1493 = vmul.f32 %v1459, %v1482
        %v1494 = vmul.f32 %v1460, %v1492
        %v1496 = vperm.slane %v1442, 0
        %v1498 = vmul.f32 %v1493, %v1496
        %v1499 = vmul.f32 %v1494, %v1496
        %v1501 = vperm.slane %v1443, 0
        %v1503 = vadd.f32 %v1498, %v1501
        %v1504 = vadd.f32 %v1499, %v1501
        %v1505 = vpack.c.bf16 %v1504, %v1503
        %v1506 = vld [vmem:[#allocation10] sm:$0xf]
        %v1507 = vld [vmem:[#allocation10 + $0x4] sm:$0xf]
        %v1508 = vld [vmem:[#allocation10 + $0x8] sm:$0xf]
        %v1509 = vld [vmem:[#allocation10 + $0xc] sm:$0xf]
        %v1510 = vld [vmem:[%s10] sm:$0x1]
        %v1512 = vperm.slane %v1510, 0
        %v1518 = vunpack.c.l.b16 %v1506
        %v1519 = vunpack.c.l.b16 %v1507
        %v1520 = vunpack.c.l.b16 %v1508
        %v1521 = vunpack.c.l.b16 %v1509
        %v1522 = vpack.c.b16 %v1519, %v1518
        %v1523 = vpack.c.b16 %v1521, %v1520
        %v1527 = vsel %vm1419, %v1505, 0
        %1529 = vmatpush.bf16.msra.mxu0 0
        %1530 = vmatpush.bf16.msra.mxu0 0
        %1531 = vmatpush.bf16.msra.mxu0 0
        %1532 = vmatpush.bf16.msra.mxu0 0
        %1533 = vmatpush.bf16.msra.mxu0 0
        %1534 = vmatpush.bf16.msra.mxu0 0
        %1535 = vmatpush.bf16.msra.mxu0 %v1523
        %1536 = vmatpush.bf16.msra.mxu0 %v1522
        %1537 = vmatmul.bf16.gmra.mxu0 %v1527
        %v1538 = vpop.f32.mrf.mxu0
        %v1539 = vadd.f32 %v1512, %v1538
        %v1540 = vpop.f32.mrf.mxu0
        %v1541 = vadd.f32 %v1512, %v1540
        %1542 = vdwg.mxu0
        %v1543 = vmul.f32 %v1539, 0.5
        %v1544 = vmul.f32 %v1541, 0.5
        %v1545 = vmul.f32 %v1539, 0.044715
        %v1546 = vmul.f32 %v1541, 0.044715
        %v1547 = vmul.f32 %v1545, %v1539
        %v1548 = vmul.f32 %v1546, %v1541
        %v1549 = vmul.f32 %v1547, %v1539
        %v1550 = vmul.f32 %v1548, %v1541
        %v1551 = vadd.f32 %v1539, %v1549
        %v1552 = vadd.f32 %v1541, %v1550
        %v1553 = vmul.f32 %v1551, 0.7978846
        %v1554 = vmul.f32 %v1552, 0.7978846
        %v1555 = vtanh.pop %v1553
        %v1556 = vtanh.pop %v1554
        %v1557 = vadd.f32 %v1555, 1.0
        %v1558 = vadd.f32 %v1556, 1.0
        %v1559 = vmul.f32 %v1543, %v1557
        %v1560 = vmul.f32 %v1544, %v1558
        %v1561 = vpack.c.bf16 %v1560, %v1559
        %v1562 = vld [vmem:[%s11] sm:$0xf]
        %v1563 = vld [vmem:[%s11 + $0x4] sm:$0xf]
        %v1564 = vld [vmem:[%s11 + $0x8] sm:$0xf]
        %v1565 = vld [vmem:[%s11 + $0xc] sm:$0xf]
        %v1566 = vld [vmem:[%s11 + $0x10] sm:$0xf]
        %v1567 = vld [vmem:[%s11 + $0x14] sm:$0xf]
        %v1568 = vld [vmem:[%s11 + $0x18] sm:$0xf]
        %v1569 = vld [vmem:[%s11 + $0x1c] sm:$0xf]
        %v1570 = vld [vmem:[%s11 + $0x20] sm:$0xf]
        %v1571 = vld [vmem:[%s11 + $0x24] sm:$0xf]
        %v1572 = vld [vmem:[%s11 + $0x28] sm:$0xf]
        %v1573 = vld [vmem:[%s11 + $0x2c] sm:$0xf]
        %v1574 = vld [vmem:[%s11 + $0x30] sm:$0xf]
        %v1575 = vld [vmem:[%s11 + $0x34] sm:$0xf]
        %v1576 = vld [vmem:[%s11 + $0x38] sm:$0xf]
        %v1577 = vld [vmem:[%s11 + $0x3c] sm:$0xf]
        %v1578 = vld [vmem:[%s12] sm:$0x1]
        %v1580 = vperm.slane %v1578, 0
        %v1598 = vunpack.c.l.b16 %v1562
        %v1599 = vunpack.c.l.b16 %v1563
        %v1600 = vunpack.c.l.b16 %v1564
        %v1601 = vunpack.c.l.b16 %v1565
        %v1602 = vunpack.c.l.b16 %v1566
        %v1603 = vunpack.c.l.b16 %v1567
        %v1604 = vunpack.c.l.b16 %v1568
        %v1605 = vunpack.c.l.b16 %v1569
        %v1606 = vunpack.c.l.b16 %v1570
        %v1607 = vunpack.c.l.b16 %v1571
        %v1608 = vunpack.c.l.b16 %v1572
        %v1609 = vunpack.c.l.b16 %v1573
        %v1610 = vunpack.c.l.b16 %v1574
        %v1611 = vunpack.c.l.b16 %v1575
        %v1612 = vunpack.c.l.b16 %v1576
        %v1613 = vunpack.c.l.b16 %v1577
        %v1614 = vpack.c.b16 %v1599, %v1598
        %v1615 = vpack.c.b16 %v1601, %v1600
        %v1616 = vpack.c.b16 %v1603, %v1602
        %v1617 = vpack.c.b16 %v1605, %v1604
        %v1618 = vpack.c.b16 %v1607, %v1606
        %v1619 = vpack.c.b16 %v1609, %v1608
        %v1620 = vpack.c.b16 %v1611, %v1610
        %v1621 = vpack.c.b16 %v1613, %v1612
        %1630 = vmatpush.bf16.msra.mxu0 %v1621
        %1631 = vmatpush.bf16.msra.mxu0 %v1620
        %1632 = vmatpush.bf16.msra.mxu0 %v1619
        %1633 = vmatpush.bf16.msra.mxu0 %v1618
        %1634 = vmatpush.bf16.msra.mxu0 %v1617
        %1635 = vmatpush.bf16.msra.mxu0 %v1616
        %1636 = vmatpush.bf16.msra.mxu0 %v1615
        %1637 = vmatpush.bf16.msra.mxu0 %v1614
        %1638 = vmatmul.bf16.gmra.mxu0 %v1561
        %v1639 = vpop.f32.mrf.mxu0
        %v1640 = vadd.f32 %v1580, %v1639
        %v1641 = vpop.f32.mrf.mxu0
        %v1642 = vadd.f32 %v1580, %v1641
        %1643 = vdwg.mxu0
        %v1644 = vadd.f32 %v1440, %v1640
        %v1645 = vadd.f32 %v1441, %v1642
        %1646 = vst.msk [vmem:[%s495] sm:$0xff] %vm1419, %v1644
        %1647 = vst.msk [vmem:[%s495 + $0x8] sm:$0xff] %vm1419, %v1645
        %s1648 = sand.u32 %s329, 1
        %s1649 = scalar_lea.sflag [#allocation7], %s1648
        %s1650 = sand.u32 %s329, 1
        %s1651 = smul.addr %s1650, 16
        %s1652 = scalar_lea.vmem [#allocation11], %s1651
        // Predicated region
        $region96: #{tpu_custom_call.1} parent=71 // pred_check
          %p1653 = pneg %p339
        $region97: #{tpu_custom_call.1} parent=71 // pred_check_branch
          %1655 = sbr.rel (%p1653) target = $region99
        $region98: #{tpu_custom_call.1} parent=71 // pred_region
          %s1656 = smul.u32 2, %s34
          %1658 = vsyncadd %s1649, 0
          %s1659 = smul.addr %s33, 4
          %s1660 = sadd.s32 %s1656, %s1659
          %s1661 = smul.addr %s1660, 8
          %s1662 = scalar_lea.hbm %s13, %s1661
          %s1663 = sshll.u32 %s1652, 4
          %s1664 = int_to_ptr.vmem [resolvable:$true] %s1663
          %s1665 = sshll.u32 %s1662, 4
          %s1666 = int_to_ptr.hbm [resolvable:$true] %s1665
          %1671 = dma.vmem_to_hbm [thread:$0]  %s1664, 256, %s1666, %s1649, 128, 128, 8
        $region99: #{tpu_custom_call.1} parent=71 // pred_fallthru
          _
      $region72: #{tpu_custom_call.1} parent=5 // pred_fallthru
        _
      %p1672 = scmp.le.s32.totalorder 2, %s24
      // Predicated region
      $region100: #{tpu_custom_call.1} parent=5 // pred_check
        %p1673 = pneg %p1672
      $region101: #{tpu_custom_call.1} parent=5 // pred_check_branch
        %1675 = sbr.rel (%p1673) target = $region103
      $region102: #{tpu_custom_call.1} parent=5 // pred_region
        %s1676 = ssub.s32 %s24, 2
        // Predicated region
        $region104: #{tpu_custom_call.1} parent=102 // pred_check
          %p1677 = pneg %p345
        $region105: #{tpu_custom_call.1} parent=102 // pred_check_branch
          %1679 = sbr.rel (%p1677) target = $region107
        $region106: #{tpu_custom_call.1} parent=102 // pred_region
          %s1680 = sand.u32 %s330, 1
          %s1681 = scalar_lea.sflag [#allocation7], %s1680
          %s1682 = sand.u32 %s330, 1
          %s1683 = smul.addr %s1682, 16
          %s1684 = scalar_lea.vmem [#allocation11], %s1683
          %1686 = dma.done %s1681, 256
        $region107: #{tpu_custom_call.1} parent=102 // pred_fallthru
          _
      $region103: #{tpu_custom_call.1} parent=5 // pred_fallthru
        _
    $region6: #{tpu_custom_call.1} parent=1 // loop_footer
      %s28 = sadd.s32 1, %s24
    $region7: #{tpu_custom_call.1} parent=1 // loop_footer_branch
      %23 = sbr.rel target = $region3
    $region8: #{tpu_custom_call.1} parent=1 // loop_exit
      _
    %1687 = vsyncpa [#allocation6], 1
    %s1688 = scalar_lea.sflag [#allocation6], 1
    %1689 = vsyncpa %s1688, 1
    %1690 = vsyncpa [#allocation9], 1
    %1691 = vsyncpa [#allocation7], 1
    %s1692 = scalar_lea.sflag [#allocation7], 1
    %1693 = vsyncpa %s1692, 1

</llo_original>
